<compile_context>
chip_gen: v5e
topology: v5e:2x2
jax: 0.10.0
libtpu: 0.0.40
codegen_flags: <defaults>
</compile_context>

<pallas_src>
import functools
import math

import jax
import jax.numpy as jnp
from jax.experimental import pallas as pl
from jax.experimental.pallas import tpu as pltpu

# ---------------- problem sizes (small, consistent with the module) ----------
D = 128            # nnode_in = nnode_out = nedge_in = nedge_out (latent dim)
HIDDEN = 128       # mlp_hidden_dim
HEADS = 8          # attention_head
DH = D // HEADS
N_NODES = 32
N_EDGES = 64
LN_EPS = 1e-5
SCALE = 1.0 / math.sqrt(float(DH))   # 0.25 — exactly representable in bf16

VMEM_SPEC = pl.BlockSpec(memory_space=pltpu.MemorySpace.VMEM)


def _dot(a, b):
    # Single bf16 MXU pass, f32 accumulation (DEFAULT precision semantics).
    # Routing operands (one-hots, P) are exact in bf16, so gathers/scatter-adds
    # only pick up bf16 rounding of the *values*, well inside tolerance.
    return jnp.dot(a.astype(jnp.bfloat16), b.astype(jnp.bfloat16),
                   preferred_element_type=jnp.float32)


def _mlp_ln(y, w1, b1, w2, b2, w3, b3, g, bt):
    """build_mlp with nmlp_layers=2 (Linear+ReLU, Linear+ReLU, Linear) + LayerNorm."""
    h = jnp.maximum(_dot(y, w1) + b1, 0.0)
    h = jnp.maximum(_dot(h, w2) + b2, 0.0)
    o = _dot(h, w3) + b3
    mu = jnp.mean(o, axis=-1, keepdims=True)
    var = jnp.mean((o - mu) ** 2, axis=-1, keepdims=True)
    return (o - mu) * jax.lax.rsqrt(var + LN_EPS) * g + bt


# ================================ fused kernel ===============================

def fused_kernel(x_ref, ef_ref, wn_ref, we_ref,
                 r_ref, rt_ref, st_ref, p_ref,
                 ew1_ref, eb1_ref, ew2_ref, eb2_ref, ew3_ref, eb3_ref, eg_ref, ebt_ref,
                 nw1_ref, nb1_ref, nw2_ref, nb2_ref, nw3_ref, nb3_ref, ng_ref, nbt_ref,
                 newx_ref, newe_ref):
    n = x_ref.shape[0]
    e = ef_ref.shape[0]

    x = x_ref[...]            # (N, D)  f32
    ef = ef_ref[...]          # (E, D)  f32
    r = r_ref[...]            # (N, E)  bf16 one-hot  (scatter-add)
    rt = rt_ref[...]          # (E, N)  bf16 one-hot  (gather at `receivers`)
    st = st_ref[...]          # (E, N)  bf16 one-hot  (gather at `senders`)
    P = p_ref[...]            # (D, D)  bf16 block-diag head-sum, pre-scaled by 1/sqrt(DH)

    # ---- Q/K/V projections: one fused (rows, D) @ (D, 3D) matmul per side ----
    nqkv = _dot(x, wn_ref[...])           # (N, 3D)
    eqkv = _dot(ef, we_ref[...])          # (E, 3D)
    xq, xk, xv = nqkv[:, 0:D], nqkv[:, D:2 * D], nqkv[:, 2 * D:3 * D]
    eq, ek, ev = eqkv[:, 0:D], eqkv[:, D:2 * D], eqkv[:, 2 * D:3 * D]

    # ---- fused one-hot gathers (2 matmuls instead of 5) -----------------------
    recv = _dot(rt, nqkv)                 # (E, 3D): xq_r | xk_r | xv_r
    send = _dot(st, nqkv[:, D:3 * D])     # (E, 2D): xk_s | xv_s
    xq_r, xk_r, xv_r = recv[:, 0:D], recv[:, D:2 * D], recv[:, 2 * D:3 * D]
    xk_s, xv_s = send[:, 0:D], send[:, D:2 * D]

    # ---- all per-head scores via ONE matmul against block-diag P --------------
    # P replicates each head's (scaled) sum back across its 16 lanes, so every
    # score / softmax tensor stays lane-dense (rows, 128).
    score_lhs = jnp.concatenate(
        [eq * ek, eq * xk_r, eq * xk_s, xq * xk, xq_r * ek], axis=0)   # (3E+N+E, D)
    scores = _dot(score_lhs, P)
    a1 = scores[0:e]                      # (E, D)
    a2 = scores[e:2 * e]
    a3 = scores[2 * e:3 * e]
    b1 = scores[3 * e:3 * e + n]          # (N, D)
    b2 = scores[3 * e + n:3 * e + n + e]  # (E, D)

    # ---- edge update: 3-way per-head softmax ----------------------------------
    amax = jnp.maximum(jnp.maximum(a1, a2), a3)
    e1 = jnp.exp(a1 - amax)
    e2 = jnp.exp(a2 - amax)
    e3 = jnp.exp(a3 - amax)
    inv_s = pl.reciprocal(e1 + e2 + e3, approx=True)
    edge_latent = (e1 * ev + e2 * xv_r + e3 * xv_s) * inv_s            # (E, D)
    newe_ref[...] = _mlp_ln(edge_latent,
                            ew1_ref[...], eb1_ref[...], ew2_ref[...], eb2_ref[...],
                            ew3_ref[...], eb3_ref[...], eg_ref[...], ebt_ref[...]) + ef

    # ---- node update: per-node softmax over {self, incoming edges} ------------
    # Stabilizer: cheap column-max bound (>= true per-node max); softmax ratios
    # are invariant to the stabilizer, so this is exact barring exp underflow
    # for per-node score spreads > ~80 (not the case for GNN-scale activations).
    col_max = jnp.max(b2, axis=0, keepdims=True)                       # (1, D)
    bmax = jnp.maximum(b1, col_max)                                    # (N, D)
    bmax_r = _dot(rt, bmax)                                            # bmax[receivers]

    b1e = jnp.exp(b1 - bmax)                                           # (N, D)
    b2e = jnp.exp(b2 - bmax_r)                                         # (E, D)
    belta = b1e + _dot(r, b2e)                                         # + scatter_add over receivers
    p2p = b1e * pl.reciprocal(belta, approx=True)                      # (N, D)
    e2p = b2e * pl.reciprocal(_dot(rt, belta), approx=True)            # belta[receivers] gather

    node_latent = p2p * xv + _dot(r, e2p * ev)                         # scatter_add to nodes (N, D)
    newx_ref[...] = _mlp_ln(node_latent,
                            nw1_ref[...], nb1_ref[...], nw2_ref[...], nb2_ref[...],
                            nw3_ref[...], nb3_ref[...], ng_ref[...], nbt_ref[...]) + x


# ============================== full forward =================================

def interaction_network_attention(params, x, edge_index, edge_features):
    senders = edge_index[0]
    receivers = edge_index[1]
    n = x.shape[0]
    e = edge_features.shape[0]
    bf16 = jnp.bfloat16

    node_ids = jnp.arange(n, dtype=receivers.dtype)
    r_onehot = (node_ids[:, None] == receivers[None, :]).astype(bf16)   # (N, E)
    rt_onehot = (receivers[:, None] == node_ids[None, :]).astype(bf16)  # (E, N)
    st_onehot = (senders[:, None] == node_ids[None, :]).astype(bf16)    # (E, N)

    # block-diagonal "sum within head, replicate across head's lanes" matrix,
    # pre-scaled by 1/sqrt(DH) = 0.25 (exact in bf16; constant-folded under jit)
    head_ids = jnp.arange(D) // DH
    P = ((head_ids[:, None] == head_ids[None, :]).astype(jnp.float32)
         * jnp.float32(SCALE)).astype(bf16)

    # weights pre-cast to bf16 (MXU rounds f32 operands to bf16 at DEFAULT
    # precision anyway, so this is numerically identical but halves DMA/VMEM)
    wn = params['node_qkv'].astype(bf16)
    we = params['edge_qkv'].astype(bf16)

    def cast_mlp(p):
        w1, b1, w2, b2, w3, b3, g, bt = p
        return (w1.astype(bf16), b1, w2.astype(bf16), b2, w3.astype(bf16), b3, g, bt)

    args = (x, edge_features, wn, we, r_onehot, rt_onehot, st_onehot, P)
    args = args + cast_mlp(params['edge_fn']) + cast_mlp(params['node_fn'])

    new_x, new_edge = pl.pallas_call(
        fused_kernel,
        out_shape=(jax.ShapeDtypeStruct((n, D), jnp.float32),
                   jax.ShapeDtypeStruct((e, D), jnp.float32)),
        in_specs=[VMEM_SPEC] * len(args),
        out_specs=(VMEM_SPEC, VMEM_SPEC),
    )(*args)
    return new_x, new_edge


# ======================== pure-JAX reference (sanity) ========================

def reference_forward(params, x, edge_index, edge_features):
    senders = edge_index[0]
    receivers = edge_index[1]
    n = x.shape[0]

    nqkv = jnp.dot(x, params['node_qkv'])
    eqkv = jnp.dot(edge_features, params['edge_qkv'])
    xq, xk, xv = jnp.split(nqkv, 3, axis=1)
    eq, ek, ev = jnp.split(eqkv, 3, axis=1)

    def heads(a):
        return a.reshape(-1, HEADS, DH)

    xqh, xkh, xvh = heads(xq), heads(xk), heads(xv)
    eqh, ekh, evh = heads(eq), heads(ek), heads(ev)

    def score(a, b):
        return jnp.sum(a * b, axis=-1) * SCALE            # (rows, H)

    a1 = score(eqh, ekh)
    a2 = score(eqh, xkh[receivers])
    a3 = score(eqh, xkh[senders])
    amax = jnp.maximum(jnp.maximum(a1, a2), a3)
    e1, e2, e3 = jnp.exp(a1 - amax), jnp.exp(a2 - amax), jnp.exp(a3 - amax)
    s = e1 + e2 + e3
    edge_latent = ((e1 / s)[:, :, None] * evh
                   + (e2 / s)[:, :, None] * xvh[receivers]
                   + (e3 / s)[:, :, None] * xvh[senders]).reshape(-1, D)

    def mlp_ln(y, p):
        w1, b1, w2, b2, w3, b3, g, bt = p
        h = jax.nn.relu(jnp.dot(y, w1) + b1)
        h = jax.nn.relu(jnp.dot(h, w2) + b2)
        o = jnp.dot(h, w3) + b3
        mu = jnp.mean(o, axis=-1, keepdims=True)
        var = jnp.mean((o - mu) ** 2, axis=-1, keepdims=True)
        return (o - mu) * jax.lax.rsqrt(var + LN_EPS) * g + bt

    new_edge = mlp_ln(edge_latent, params['edge_fn']) + edge_features

    b1 = score(xqh, xkh)                                  # (N, H)
    b2 = score(xqh[receivers], ekh)                       # (E, H)
    smax = jax.ops.segment_max(b2, receivers, num_segments=n)
    bmax = jnp.maximum(b1, smax)
    b1e = jnp.exp(b1 - bmax)
    b2e = jnp.exp(b2 - bmax[receivers])
    belta = b1e + jax.ops.segment_sum(b2e, receivers, num_segments=n)
    p2p = b1e / belta
    e2p = b2e / belta[receivers]
    node_latent = (p2p[:, :, None] * xvh
                   + jax.ops.segment_sum(e2p[:, :, None] * evh, receivers,
                                         num_segments=n)).reshape(-1, D)
    new_x = mlp_ln(node_latent, params['node_fn']) + x
    return new_x, new_edge


# =============================== parameters ==================================

def init_params(key):
    ks = jax.random.split(key, 8)

    def w(k, shape, scale=0.05):
        return jax.random.normal(k, shape, dtype=jnp.float32) * scale

    # weights stored as (in, out)  (== torch Linear weight transposed)
    node_qkv = jnp.concatenate([w(ks[0], (D, D)), w(ks[1], (D, D)), w(ks[2], (D, D))], axis=1)
    edge_qkv = jnp.concatenate([w(ks[3], (D, D)), w(ks[4], (D, D)), w(ks[5], (D, D))], axis=1)

    def mlp_params(k0):
        kk = jax.random.split(k0, 6)
        return (w(kk[0], (D, HIDDEN)), w(kk[1], (1, HIDDEN)),
                w(kk[2], (HIDDEN, HIDDEN)), w(kk[3], (1, HIDDEN)),
                w(kk[4], (HIDDEN, D)), w(kk[5], (1, D)),
                jnp.ones((1, D), jnp.float32),      # LayerNorm gamma
                jnp.zeros((1, D), jnp.float32))     # LayerNorm beta

    return {'node_qkv': node_qkv, 'edge_qkv': edge_qkv,
            'node_fn': mlp_params(ks[6]), 'edge_fn': mlp_params(ks[7])}


if __name__ == "__main__":
    key = jax.random.PRNGKey(0)
    k_p, k_x, k_e, k_s, k_r = jax.random.split(key, 5)

    params = init_params(k_p)
    x = jax.random.normal(k_x, (N_NODES, D), dtype=jnp.float32)
    edge_features = jax.random.normal(k_e, (N_EDGES, D), dtype=jnp.float32)
    senders = jax.random.randint(k_s, (N_EDGES,), 0, N_NODES)
    receivers = jax.random.randint(k_r, (N_EDGES,), 0, N_NODES)
    edge_index = jnp.stack([senders, receivers], axis=0)

    fwd = jax.jit(functools.partial(interaction_network_attention, params))
    new_x, new_e = fwd(x, edge_index, edge_features)
    jax.block_until_ready((new_x, new_e))
    assert new_x.shape == (N_NODES, D) and new_e.shape == (N_EDGES, D)

    # sanity check against a pure-JAX reference (loose tol: all matmuls inside
    # the kernel run as single bf16 MXU passes, matching DEFAULT TPU precision)
    ref_x, ref_e = jax.jit(functools.partial(reference_forward, params))(x, edge_index, edge_features)
    assert float(jnp.max(jnp.abs(new_x - ref_x))) < 0.1
    assert float(jnp.max(jnp.abs(new_e - ref_e))) < 0.1

    print("KERNEL_OK")
</pallas_src>

<mosaic_0001>
module attributes {stable_mosaic.version = 11 : i64} {
  func.func @fused_kernel(%arg0: memref<32x128xf32, #tpu.memory_space<vmem>>, %arg1: memref<64x128xf32, #tpu.memory_space<vmem>>, %arg2: memref<128x384xbf16, #tpu.memory_space<vmem>>, %arg3: memref<128x384xbf16, #tpu.memory_space<vmem>>, %arg4: memref<32x64xbf16, #tpu.memory_space<vmem>>, %arg5: memref<64x32xbf16, #tpu.memory_space<vmem>>, %arg6: memref<64x32xbf16, #tpu.memory_space<vmem>>, %arg7: memref<128x128xbf16, #tpu.memory_space<vmem>>, %arg8: memref<128x128xbf16, #tpu.memory_space<vmem>>, %arg9: memref<1x128xf32, #tpu.memory_space<vmem>>, %arg10: memref<128x128xbf16, #tpu.memory_space<vmem>>, %arg11: memref<1x128xf32, #tpu.memory_space<vmem>>, %arg12: memref<128x128xbf16, #tpu.memory_space<vmem>>, %arg13: memref<1x128xf32, #tpu.memory_space<vmem>>, %arg14: memref<1x128xf32, #tpu.memory_space<vmem>>, %arg15: memref<1x128xf32, #tpu.memory_space<vmem>>, %arg16: memref<128x128xbf16, #tpu.memory_space<vmem>>, %arg17: memref<1x128xf32, #tpu.memory_space<vmem>>, %arg18: memref<128x128xbf16, #tpu.memory_space<vmem>>, %arg19: memref<1x128xf32, #tpu.memory_space<vmem>>, %arg20: memref<128x128xbf16, #tpu.memory_space<vmem>>, %arg21: memref<1x128xf32, #tpu.memory_space<vmem>>, %arg22: memref<1x128xf32, #tpu.memory_space<vmem>>, %arg23: memref<1x128xf32, #tpu.memory_space<vmem>>, %arg24: memref<32x128xf32, #tpu.memory_space<vmem>>, %arg25: memref<64x128xf32, #tpu.memory_space<vmem>>) attributes {dimension_semantics = [], scalar_prefetch = 0 : i64, scratch_operands = 0 : i64, tpu.core_type = #tpu.core_type<tc>} {
    %c0 = arith.constant 0 : index
    %c0_0 = arith.constant 0 : index
    %0 = vector.load %arg0[%c0, %c0_0] : memref<32x128xf32, #tpu.memory_space<vmem>>, vector<32x128xf32>
    %c0_1 = arith.constant 0 : index
    %c0_2 = arith.constant 0 : index
    %1 = vector.load %arg1[%c0_1, %c0_2] : memref<64x128xf32, #tpu.memory_space<vmem>>, vector<64x128xf32>
    %c0_3 = arith.constant 0 : index
    %c0_4 = arith.constant 0 : index
    %2 = vector.load %arg4[%c0_3, %c0_4] : memref<32x64xbf16, #tpu.memory_space<vmem>>, vector<32x64xbf16>
    %c0_5 = arith.constant 0 : index
    %c0_6 = arith.constant 0 : index
    %3 = vector.load %arg5[%c0_5, %c0_6] : memref<64x32xbf16, #tpu.memory_space<vmem>>, vector<64x32xbf16>
    %c0_7 = arith.constant 0 : index
    %c0_8 = arith.constant 0 : index
    %4 = vector.load %arg6[%c0_7, %c0_8] : memref<64x32xbf16, #tpu.memory_space<vmem>>, vector<64x32xbf16>
    %c0_9 = arith.constant 0 : index
    %c0_10 = arith.constant 0 : index
    %5 = vector.load %arg7[%c0_9, %c0_10] : memref<128x128xbf16, #tpu.memory_space<vmem>>, vector<128x128xbf16>
    %c0_11 = arith.constant 0 : index
    %c0_12 = arith.constant 0 : index
    %6 = vector.load %arg2[%c0_11, %c0_12] : memref<128x384xbf16, #tpu.memory_space<vmem>>, vector<128x384xbf16>
    %7 = arith.truncf %0 : vector<32x128xf32> to vector<32x128xbf16>
    %cst = arith.constant dense<0.000000e+00> : vector<32x384xf32>
    %8 = tpu.matmul %7, %6, %cst {dimension_numbers = #tpu.dot_dimension_numbers<[1], [0], [0], [1], [0, 0, 1, 1], [], []>} : vector<32x128xbf16>, vector<128x384xbf16>, vector<32x384xf32> -> vector<32x384xf32>
    %c0_13 = arith.constant 0 : index
    %c0_14 = arith.constant 0 : index
    %9 = vector.load %arg3[%c0_13, %c0_14] : memref<128x384xbf16, #tpu.memory_space<vmem>>, vector<128x384xbf16>
    %10 = arith.truncf %1 : vector<64x128xf32> to vector<64x128xbf16>
    %cst_15 = arith.constant dense<0.000000e+00> : vector<64x384xf32>
    %11 = tpu.matmul %10, %9, %cst_15 {dimension_numbers = #tpu.dot_dimension_numbers<[1], [0], [0], [1], [0, 0, 1, 1], [], []>} : vector<64x128xbf16>, vector<128x384xbf16>, vector<64x384xf32> -> vector<64x384xf32>
    %12 = vector.extract_strided_slice %8 {offsets = [0, 0], sizes = [32, 128], strides = [1, 1]} : vector<32x384xf32> to vector<32x128xf32>
    %13 = vector.extract_strided_slice %8 {offsets = [0, 128], sizes = [32, 128], strides = [1, 1]} : vector<32x384xf32> to vector<32x128xf32>
    %14 = vector.extract_strided_slice %8 {offsets = [0, 256], sizes = [32, 128], strides = [1, 1]} : vector<32x384xf32> to vector<32x128xf32>
    %15 = vector.extract_strided_slice %11 {offsets = [0, 0], sizes = [64, 128], strides = [1, 1]} : vector<64x384xf32> to vector<64x128xf32>
    %16 = vector.extract_strided_slice %11 {offsets = [0, 128], sizes = [64, 128], strides = [1, 1]} : vector<64x384xf32> to vector<64x128xf32>
    %17 = vector.extract_strided_slice %11 {offsets = [0, 256], sizes = [64, 128], strides = [1, 1]} : vector<64x384xf32> to vector<64x128xf32>
    %18 = arith.truncf %8 : vector<32x384xf32> to vector<32x384xbf16>
    %cst_16 = arith.constant dense<0.000000e+00> : vector<64x384xf32>
    %19 = tpu.matmul %3, %18, %cst_16 {dimension_numbers = #tpu.dot_dimension_numbers<[1], [0], [0], [1], [0, 0, 1, 1], [], []>} : vector<64x32xbf16>, vector<32x384xbf16>, vector<64x384xf32> -> vector<64x384xf32>
    %20 = vector.extract_strided_slice %8 {offsets = [0, 128], sizes = [32, 256], strides = [1, 1]} : vector<32x384xf32> to vector<32x256xf32>
    %21 = arith.truncf %20 : vector<32x256xf32> to vector<32x256xbf16>
    %cst_17 = arith.constant dense<0.000000e+00> : vector<64x256xf32>
    %22 = tpu.matmul %4, %21, %cst_17 {dimension_numbers = #tpu.dot_dimension_numbers<[1], [0], [0], [1], [0, 0, 1, 1], [], []>} : vector<64x32xbf16>, vector<32x256xbf16>, vector<64x256xf32> -> vector<64x256xf32>
    %23 = vector.extract_strided_slice %19 {offsets = [0, 0], sizes = [64, 128], strides = [1, 1]} : vector<64x384xf32> to vector<64x128xf32>
    %24 = vector.extract_strided_slice %19 {offsets = [0, 128], sizes = [64, 128], strides = [1, 1]} : vector<64x384xf32> to vector<64x128xf32>
    %25 = vector.extract_strided_slice %19 {offsets = [0, 256], sizes = [64, 128], strides = [1, 1]} : vector<64x384xf32> to vector<64x128xf32>
    %26 = vector.extract_strided_slice %22 {offsets = [0, 0], sizes = [64, 128], strides = [1, 1]} : vector<64x256xf32> to vector<64x128xf32>
    %27 = vector.extract_strided_slice %22 {offsets = [0, 128], sizes = [64, 128], strides = [1, 1]} : vector<64x256xf32> to vector<64x128xf32>
    %28 = arith.mulf %15, %16 : vector<64x128xf32>
    %29 = arith.mulf %15, %24 : vector<64x128xf32>
    %30 = arith.mulf %15, %26 : vector<64x128xf32>
    %31 = arith.mulf %12, %13 : vector<32x128xf32>
    %32 = arith.mulf %23, %16 : vector<64x128xf32>
    %33 = tpu.concatenate %28, %29, %30, %31, %32 in 0 : vector<64x128xf32>, vector<64x128xf32>, vector<64x128xf32>, vector<32x128xf32>, vector<64x128xf32> -> vector<288x128xf32>
    %34 = arith.truncf %33 : vector<288x128xf32> to vector<288x128xbf16>
    %cst_18 = arith.constant dense<0.000000e+00> : vector<288x128xf32>
    %35 = tpu.matmul %34, %5, %cst_18 {dimension_numbers = #tpu.dot_dimension_numbers<[1], [0], [0], [1], [0, 0, 1, 1], [], []>} : vector<288x128xbf16>, vector<128x128xbf16>, vector<288x128xf32> -> vector<288x128xf32>
    %36 = vector.extract_strided_slice %35 {offsets = [0, 0], sizes = [64, 128], strides = [1, 1]} : vector<288x128xf32> to vector<64x128xf32>
    %37 = vector.extract_strided_slice %35 {offsets = [64, 0], sizes = [64, 128], strides = [1, 1]} : vector<288x128xf32> to vector<64x128xf32>
    %38 = vector.extract_strided_slice %35 {offsets = [128, 0], sizes = [64, 128], strides = [1, 1]} : vector<288x128xf32> to vector<64x128xf32>
    %39 = vector.extract_strided_slice %35 {offsets = [192, 0], sizes = [32, 128], strides = [1, 1]} : vector<288x128xf32> to vector<32x128xf32>
    %40 = vector.extract_strided_slice %35 {offsets = [224, 0], sizes = [64, 128], strides = [1, 1]} : vector<288x128xf32> to vector<64x128xf32>
    %41 = arith.maximumf %36, %37 : vector<64x128xf32>
    %42 = arith.maximumf %41, %38 : vector<64x128xf32>
    %43 = arith.subf %36, %42 : vector<64x128xf32>
    %44 = math.exp %43 : vector<64x128xf32>
    %45 = arith.subf %37, %42 : vector<64x128xf32>
    %46 = math.exp %45 : vector<64x128xf32>
    %47 = arith.subf %38, %42 : vector<64x128xf32>
    %48 = math.exp %47 : vector<64x128xf32>
    %49 = arith.addf %44, %46 : vector<64x128xf32>
    %50 = arith.addf %49, %48 : vector<64x128xf32>
    %51 = tpu.reciprocal %50 {approx = true} : vector<64x128xf32> -> vector<64x128xf32>
    %52 = arith.mulf %44, %17 : vector<64x128xf32>
    %53 = arith.mulf %46, %25 : vector<64x128xf32>
    %54 = arith.addf %52, %53 : vector<64x128xf32>
    %55 = arith.mulf %48, %27 : vector<64x128xf32>
    %56 = arith.addf %54, %55 : vector<64x128xf32>
    %57 = arith.mulf %56, %51 : vector<64x128xf32>
    %c0_19 = arith.constant 0 : index
    %c0_20 = arith.constant 0 : index
    %58 = vector.load %arg8[%c0_19, %c0_20] : memref<128x128xbf16, #tpu.memory_space<vmem>>, vector<128x128xbf16>
    %c0_21 = arith.constant 0 : index
    %c0_22 = arith.constant 0 : index
    %59 = vector.load %arg9[%c0_21, %c0_22] : memref<1x128xf32, #tpu.memory_space<vmem>>, vector<1x128xf32>
    %c0_23 = arith.constant 0 : index
    %c0_24 = arith.constant 0 : index
    %60 = vector.load %arg10[%c0_23, %c0_24] : memref<128x128xbf16, #tpu.memory_space<vmem>>, vector<128x128xbf16>
    %c0_25 = arith.constant 0 : index
    %c0_26 = arith.constant 0 : index
    %61 = vector.load %arg11[%c0_25, %c0_26] : memref<1x128xf32, #tpu.memory_space<vmem>>, vector<1x128xf32>
    %c0_27 = arith.constant 0 : index
    %c0_28 = arith.constant 0 : index
    %62 = vector.load %arg12[%c0_27, %c0_28] : memref<128x128xbf16, #tpu.memory_space<vmem>>, vector<128x128xbf16>
    %c0_29 = arith.constant 0 : index
    %c0_30 = arith.constant 0 : index
    %63 = vector.load %arg13[%c0_29, %c0_30] : memref<1x128xf32, #tpu.memory_space<vmem>>, vector<1x128xf32>
    %c0_31 = arith.constant 0 : index
    %c0_32 = arith.constant 0 : index
    %64 = vector.load %arg14[%c0_31, %c0_32] : memref<1x128xf32, #tpu.memory_space<vmem>>, vector<1x128xf32>
    %c0_33 = arith.constant 0 : index
    %c0_34 = arith.constant 0 : index
    %65 = vector.load %arg15[%c0_33, %c0_34] : memref<1x128xf32, #tpu.memory_space<vmem>>, vector<1x128xf32>
    %66 = arith.truncf %57 : vector<64x128xf32> to vector<64x128xbf16>
    %cst_35 = arith.constant dense<0.000000e+00> : vector<64x128xf32>
    %67 = tpu.matmul %66, %58, %cst_35 {dimension_numbers = #tpu.dot_dimension_numbers<[1], [0], [0], [1], [0, 0, 1, 1], [], []>} : vector<64x128xbf16>, vector<128x128xbf16>, vector<64x128xf32> -> vector<64x128xf32>
    %68 = vector.broadcast %59 : vector<1x128xf32> to vector<64x128xf32>
    %69 = arith.addf %67, %68 : vector<64x128xf32>
    %cst_36 = arith.constant 0.000000e+00 : f32
    %70 = vector.broadcast %cst_36 : f32 to vector<64x128xf32>
    %71 = arith.maximumf %69, %70 : vector<64x128xf32>
    %72 = arith.truncf %71 : vector<64x128xf32> to vector<64x128xbf16>
    %cst_37 = arith.constant dense<0.000000e+00> : vector<64x128xf32>
    %73 = tpu.matmul %72, %60, %cst_37 {dimension_numbers = #tpu.dot_dimension_numbers<[1], [0], [0], [1], [0, 0, 1, 1], [], []>} : vector<64x128xbf16>, vector<128x128xbf16>, vector<64x128xf32> -> vector<64x128xf32>
    %74 = vector.broadcast %61 : vector<1x128xf32> to vector<64x128xf32>
    %75 = arith.addf %73, %74 : vector<64x128xf32>
    %cst_38 = arith.constant 0.000000e+00 : f32
    %76 = vector.broadcast %cst_38 : f32 to vector<64x128xf32>
    %77 = arith.maximumf %75, %76 : vector<64x128xf32>
    %78 = arith.truncf %77 : vector<64x128xf32> to vector<64x128xbf16>
    %cst_39 = arith.constant dense<0.000000e+00> : vector<64x128xf32>
    %79 = tpu.matmul %78, %62, %cst_39 {dimension_numbers = #tpu.dot_dimension_numbers<[1], [0], [0], [1], [0, 0, 1, 1], [], []>} : vector<64x128xbf16>, vector<128x128xbf16>, vector<64x128xf32> -> vector<64x128xf32>
    %80 = vector.broadcast %63 : vector<1x128xf32> to vector<64x128xf32>
    %81 = arith.addf %79, %80 : vector<64x128xf32>
    %cst_40 = arith.constant dense<0.000000e+00> : vector<64xf32>
    %82 = vector.multi_reduction <add>, %81, %cst_40 [1] : vector<64x128xf32> to vector<64xf32>
    %83 = vector.shape_cast %82 : vector<64xf32> to vector<64x1xf32>
    %cst_41 = arith.constant 1.280000e+02 : f32
    %84 = vector.broadcast %cst_41 : f32 to vector<64x1xf32>
    %85 = arith.divf %83, %84 : vector<64x1xf32>
    %86 = vector.broadcast %85 : vector<64x1xf32> to vector<64x128xf32>
    %87 = arith.subf %81, %86 : vector<64x128xf32>
    %88 = arith.mulf %87, %87 : vector<64x128xf32>
    %cst_42 = arith.constant dense<0.000000e+00> : vector<64xf32>
    %89 = vector.multi_reduction <add>, %88, %cst_42 [1] : vector<64x128xf32> to vector<64xf32>
    %90 = vector.shape_cast %89 : vector<64xf32> to vector<64x1xf32>
    %cst_43 = arith.constant 1.280000e+02 : f32
    %91 = vector.broadcast %cst_43 : f32 to vector<64x1xf32>
    %92 = arith.divf %90, %91 : vector<64x1xf32>
    %93 = vector.broadcast %85 : vector<64x1xf32> to vector<64x128xf32>
    %94 = arith.subf %81, %93 : vector<64x128xf32>
    %cst_44 = arith.constant 9.99999974E-6 : f32
    %95 = vector.broadcast %cst_44 : f32 to vector<64x1xf32>
    %96 = arith.addf %92, %95 : vector<64x1xf32>
    %97 = math.rsqrt %96 : vector<64x1xf32>
    %98 = vector.broadcast %97 : vector<64x1xf32> to vector<64x128xf32>
    %99 = arith.mulf %94, %98 : vector<64x128xf32>
    %100 = vector.broadcast %64 : vector<1x128xf32> to vector<64x128xf32>
    %101 = arith.mulf %99, %100 : vector<64x128xf32>
    %102 = vector.broadcast %65 : vector<1x128xf32> to vector<64x128xf32>
    %103 = arith.addf %101, %102 : vector<64x128xf32>
    %104 = arith.addf %103, %1 : vector<64x128xf32>
    %c0_45 = arith.constant 0 : index
    %c0_46 = arith.constant 0 : index
    %105 = vector.load %arg25[%c0_45, %c0_46] : memref<64x128xf32, #tpu.memory_space<vmem>>, vector<64x128xf32>
    tpu.vector_store %arg25[%c0_45, %c0_46], %104 {strides = array<i32>} : memref<64x128xf32, #tpu.memory_space<vmem>>, vector<64x128xf32>,
    %cst_47 = arith.constant dense<0xFF800000> : vector<128xf32>
    %106 = vector.multi_reduction <maximumf>, %40, %cst_47 [0] : vector<64x128xf32> to vector<128xf32>
    %107 = vector.shape_cast %106 : vector<128xf32> to vector<1x128xf32>
    %108 = vector.broadcast %107 : vector<1x128xf32> to vector<32x128xf32>
    %109 = arith.maximumf %39, %108 : vector<32x128xf32>
    %110 = arith.truncf %109 : vector<32x128xf32> to vector<32x128xbf16>
    %cst_48 = arith.constant dense<0.000000e+00> : vector<64x128xf32>
    %111 = tpu.matmul %3, %110, %cst_48 {dimension_numbers = #tpu.dot_dimension_numbers<[1], [0], [0], [1], [0, 0, 1, 1], [], []>} : vector<64x32xbf16>, vector<32x128xbf16>, vector<64x128xf32> -> vector<64x128xf32>
    %112 = arith.subf %39, %109 : vector<32x128xf32>
    %113 = math.exp %112 : vector<32x128xf32>
    %114 = arith.subf %40, %111 : vector<64x128xf32>
    %115 = math.exp %114 : vector<64x128xf32>
    %116 = arith.truncf %115 : vector<64x128xf32> to vector<64x128xbf16>
    %cst_49 = arith.constant dense<0.000000e+00> : vector<32x128xf32>
    %117 = tpu.matmul %2, %116, %cst_49 {dimension_numbers = #tpu.dot_dimension_numbers<[1], [0], [0], [1], [0, 0, 1, 1], [], []>} : vector<32x64xbf16>, vector<64x128xbf16>, vector<32x128xf32> -> vector<32x128xf32>
    %118 = arith.addf %113, %117 : vector<32x128xf32>
    %119 = tpu.reciprocal %118 {approx = true} : vector<32x128xf32> -> vector<32x128xf32>
    %120 = arith.mulf %113, %119 : vector<32x128xf32>
    %121 = arith.truncf %118 : vector<32x128xf32> to vector<32x128xbf16>
    %cst_50 = arith.constant dense<0.000000e+00> : vector<64x128xf32>
    %122 = tpu.matmul %3, %121, %cst_50 {dimension_numbers = #tpu.dot_dimension_numbers<[1], [0], [0], [1], [0, 0, 1, 1], [], []>} : vector<64x32xbf16>, vector<32x128xbf16>, vector<64x128xf32> -> vector<64x128xf32>
    %123 = tpu.reciprocal %122 {approx = true} : vector<64x128xf32> -> vector<64x128xf32>
    %124 = arith.mulf %115, %123 : vector<64x128xf32>
    %125 = arith.mulf %120, %14 : vector<32x128xf32>
    %126 = arith.mulf %124, %17 : vector<64x128xf32>
    %127 = arith.truncf %126 : vector<64x128xf32> to vector<64x128xbf16>
    %cst_51 = arith.constant dense<0.000000e+00> : vector<32x128xf32>
    %128 = tpu.matmul %2, %127, %cst_51 {dimension_numbers = #tpu.dot_dimension_numbers<[1], [0], [0], [1], [0, 0, 1, 1], [], []>} : vector<32x64xbf16>, vector<64x128xbf16>, vector<32x128xf32> -> vector<32x128xf32>
    %129 = arith.addf %125, %128 : vector<32x128xf32>
    %c0_52 = arith.constant 0 : index
    %c0_53 = arith.constant 0 : index
    %130 = vector.load %arg16[%c0_52, %c0_53] : memref<128x128xbf16, #tpu.memory_space<vmem>>, vector<128x128xbf16>
    %c0_54 = arith.constant 0 : index
    %c0_55 = arith.constant 0 : index
    %131 = vector.load %arg17[%c0_54, %c0_55] : memref<1x128xf32, #tpu.memory_space<vmem>>, vector<1x128xf32>
    %c0_56 = arith.constant 0 : index
    %c0_57 = arith.constant 0 : index
    %132 = vector.load %arg18[%c0_56, %c0_57] : memref<128x128xbf16, #tpu.memory_space<vmem>>, vector<128x128xbf16>
    %c0_58 = arith.constant 0 : index
    %c0_59 = arith.constant 0 : index
    %133 = vector.load %arg19[%c0_58, %c0_59] : memref<1x128xf32, #tpu.memory_space<vmem>>, vector<1x128xf32>
    %c0_60 = arith.constant 0 : index
    %c0_61 = arith.constant 0 : index
    %134 = vector.load %arg20[%c0_60, %c0_61] : memref<128x128xbf16, #tpu.memory_space<vmem>>, vector<128x128xbf16>
    %c0_62 = arith.constant 0 : index
    %c0_63 = arith.constant 0 : index
    %135 = vector.load %arg21[%c0_62, %c0_63] : memref<1x128xf32, #tpu.memory_space<vmem>>, vector<1x128xf32>
    %c0_64 = arith.constant 0 : index
    %c0_65 = arith.constant 0 : index
    %136 = vector.load %arg22[%c0_64, %c0_65] : memref<1x128xf32, #tpu.memory_space<vmem>>, vector<1x128xf32>
    %c0_66 = arith.constant 0 : index
    %c0_67 = arith.constant 0 : index
    %137 = vector.load %arg23[%c0_66, %c0_67] : memref<1x128xf32, #tpu.memory_space<vmem>>, vector<1x128xf32>
    %138 = arith.truncf %129 : vector<32x128xf32> to vector<32x128xbf16>
    %cst_68 = arith.constant dense<0.000000e+00> : vector<32x128xf32>
    %139 = tpu.matmul %138, %130, %cst_68 {dimension_numbers = #tpu.dot_dimension_numbers<[1], [0], [0], [1], [0, 0, 1, 1], [], []>} : vector<32x128xbf16>, vector<128x128xbf16>, vector<32x128xf32> -> vector<32x128xf32>
    %140 = vector.broadcast %131 : vector<1x128xf32> to vector<32x128xf32>
    %141 = arith.addf %139, %140 : vector<32x128xf32>
    %cst_69 = arith.constant 0.000000e+00 : f32
    %142 = vector.broadcast %cst_69 : f32 to vector<32x128xf32>
    %143 = arith.maximumf %141, %142 : vector<32x128xf32>
    %144 = arith.truncf %143 : vector<32x128xf32> to vector<32x128xbf16>
    %cst_70 = arith.constant dense<0.000000e+00> : vector<32x128xf32>
    %145 = tpu.matmul %144, %132, %cst_70 {dimension_numbers = #tpu.dot_dimension_numbers<[1], [0], [0], [1], [0, 0, 1, 1], [], []>} : vector<32x128xbf16>, vector<128x128xbf16>, vector<32x128xf32> -> vector<32x128xf32>
    %146 = vector.broadcast %133 : vector<1x128xf32> to vector<32x128xf32>
    %147 = arith.addf %145, %146 : vector<32x128xf32>
    %cst_71 = arith.constant 0.000000e+00 : f32
    %148 = vector.broadcast %cst_71 : f32 to vector<32x128xf32>
    %149 = arith.maximumf %147, %148 : vector<32x128xf32>
    %150 = arith.truncf %149 : vector<32x128xf32> to vector<32x128xbf16>
    %cst_72 = arith.constant dense<0.000000e+00> : vector<32x128xf32>
    %151 = tpu.matmul %150, %134, %cst_72 {dimension_numbers = #tpu.dot_dimension_numbers<[1], [0], [0], [1], [0, 0, 1, 1], [], []>} : vector<32x128xbf16>, vector<128x128xbf16>, vector<32x128xf32> -> vector<32x128xf32>
    %152 = vector.broadcast %135 : vector<1x128xf32> to vector<32x128xf32>
    %153 = arith.addf %151, %152 : vector<32x128xf32>
    %cst_73 = arith.constant dense<0.000000e+00> : vector<32xf32>
    %154 = vector.multi_reduction <add>, %153, %cst_73 [1] : vector<32x128xf32> to vector<32xf32>
    %155 = vector.shape_cast %154 : vector<32xf32> to vector<32x1xf32>
    %cst_74 = arith.constant 1.280000e+02 : f32
    %156 = vector.broadcast %cst_74 : f32 to vector<32x1xf32>
    %157 = arith.divf %155, %156 : vector<32x1xf32>
    %158 = vector.broadcast %157 : vector<32x1xf32> to vector<32x128xf32>
    %159 = arith.subf %153, %158 : vector<32x128xf32>
    %160 = arith.mulf %159, %159 : vector<32x128xf32>
    %cst_75 = arith.constant dense<0.000000e+00> : vector<32xf32>
    %161 = vector.multi_reduction <add>, %160, %cst_75 [1] : vector<32x128xf32> to vector<32xf32>
    %162 = vector.shape_cast %161 : vector<32xf32> to vector<32x1xf32>
    %cst_76 = arith.constant 1.280000e+02 : f32
    %163 = vector.broadcast %cst_76 : f32 to vector<32x1xf32>
    %164 = arith.divf %162, %163 : vector<32x1xf32>
    %165 = vector.broadcast %157 : vector<32x1xf32> to vector<32x128xf32>
    %166 = arith.subf %153, %165 : vector<32x128xf32>
    %cst_77 = arith.constant 9.99999974E-6 : f32
    %167 = vector.broadcast %cst_77 : f32 to vector<32x1xf32>
    %168 = arith.addf %164, %167 : vector<32x1xf32>
    %169 = math.rsqrt %168 : vector<32x1xf32>
    %170 = vector.broadcast %169 : vector<32x1xf32> to vector<32x128xf32>
    %171 = arith.mulf %166, %170 : vector<32x128xf32>
    %172 = vector.broadcast %136 : vector<1x128xf32> to vector<32x128xf32>
    %173 = arith.mulf %171, %172 : vector<32x128xf32>
    %174 = vector.broadcast %137 : vector<1x128xf32> to vector<32x128xf32>
    %175 = arith.addf %173, %174 : vector<32x128xf32>
    %176 = arith.addf %175, %0 : vector<32x128xf32>
    %c0_78 = arith.constant 0 : index
    %c0_79 = arith.constant 0 : index
    %177 = vector.load %arg24[%c0_78, %c0_79] : memref<32x128xf32, #tpu.memory_space<vmem>>, vector<32x128xf32>
    tpu.vector_store %arg24[%c0_78, %c0_79], %176 {strides = array<i32>} : memref<32x128xf32, #tpu.memory_space<vmem>>, vector<32x128xf32>,
    return
  }
}

</mosaic_0001>

<llo_original>
// kernel: interaction_network_attention.1
$region0: #{interaction_network_attention.1}
  #allocation0 [shape = 'u32[]', space=smem, size = 0x4, offset = 0x4, fixed_abs, tag = 'smem constant byte address 0x4 - core index']
  #allocation1 [shape = 'u32[72,128]{1,0:T(1,128)}', space=vmem, size = 0x9000, scoped, tag = 'internal scratch']
  %s0 = inlined_call_operand.hbm [shape: f32[32,128], index: 0, kind: input, shape index: {}]
  %s1 = inlined_call_operand.vmem [shape: f32[64,128], index: 1, kind: input, shape index: {}]
  %s2 = inlined_call_operand.hbm [shape: bf16[128,384], index: 2, kind: input, shape index: {}]
  %s3 = inlined_call_operand.hbm [shape: bf16[128,384], index: 3, kind: input, shape index: {}]
  %s4 = inlined_call_operand.vmem [shape: bf16[32,64], index: 4, kind: input, shape index: {}]
  %s5 = inlined_call_operand.vmem [shape: bf16[64,32], index: 5, kind: input, shape index: {}]
  %s6 = inlined_call_operand.vmem [shape: bf16[64,32], index: 6, kind: input, shape index: {}]
  %s7 = inlined_call_operand.vmem [shape: bf16[128,128], index: 7, kind: input, shape index: {}]
  %s8 = inlined_call_operand.vmem [shape: bf16[128,128], index: 8, kind: input, shape index: {}]
  %s9 = inlined_call_operand.vmem [shape: f32[1,128], index: 9, kind: input, shape index: {}]
  %s10 = inlined_call_operand.hbm [shape: bf16[128,128], index: 10, kind: input, shape index: {}]
  %s11 = inlined_call_operand.vmem [shape: f32[1,128], index: 11, kind: input, shape index: {}]
  %s12 = inlined_call_operand.hbm [shape: bf16[128,128], index: 12, kind: input, shape index: {}]
  %s13 = inlined_call_operand.vmem [shape: f32[1,128], index: 13, kind: input, shape index: {}]
  %s14 = inlined_call_operand.vmem [shape: f32[1,128], index: 14, kind: input, shape index: {}, may-alias: {14,22}]
  %s15 = inlined_call_operand.vmem [shape: f32[1,128], index: 15, kind: input, shape index: {}, may-alias: {15,23}]
  %s16 = inlined_call_operand.hbm [shape: bf16[128,128], index: 16, kind: input, shape index: {}]
  %s17 = inlined_call_operand.vmem [shape: f32[1,128], index: 17, kind: input, shape index: {}]
  %s18 = inlined_call_operand.hbm [shape: bf16[128,128], index: 18, kind: input, shape index: {}]
  %s19 = inlined_call_operand.vmem [shape: f32[1,128], index: 19, kind: input, shape index: {}]
  %s20 = inlined_call_operand.hbm [shape: bf16[128,128], index: 20, kind: input, shape index: {}]
  %s21 = inlined_call_operand.vmem [shape: f32[1,128], index: 21, kind: input, shape index: {}]
  %s22 = inlined_call_operand.vmem [shape: f32[1,128], index: 22, kind: input, shape index: {}, may-alias: {14,22}]
  %s23 = inlined_call_operand.vmem [shape: f32[1,128], index: 23, kind: input, shape index: {}, may-alias: {15,23}]
  %s24 = inlined_call_operand.hbm [shape: f32[32,128], index: 24, kind: output, shape index: {0}]
  %s25 = inlined_call_operand.hbm [shape: f32[64,128], index: 25, kind: output, shape index: {1}]
  %26 = xla_tuple %s24, %s25
  %s27 = sld [smem:[#allocation0]]
  $region146: #{interaction_network_attention.1} parent=0
    _
  %s29 = ssub.s32 1, %s27
  %s30 = scalar_select 0, %s29, %s27
  $region1: #{interaction_network_attention.1} parent=0
    #allocation2 [shape = 'u8[16384]{0}', space=vmem, size = 0x4000, scoped, tag = 'input window, operand 0, single buffered']
    #allocation3 [shape = 's32[1]{0}', space=sflag, size = 0x4, scoped, tag = 'scoped memory for interaction_network_attention.1']
    #allocation4 [shape = 's32[1]{0}', space=sflag, size = 0x4, scoped, tag = 'scoped memory for interaction_network_attention.1']
    #allocation5 [shape = 'u8[98304]{0}', space=vmem, size = 0x18000, scoped, tag = 'input window, operand 2, single buffered']
    #allocation6 [shape = 's32[1]{0}', space=sflag, size = 0x4, scoped, tag = 'scoped memory for interaction_network_attention.1']
    #allocation7 [shape = 'u8[98304]{0}', space=vmem, size = 0x18000, scoped, tag = 'input window, operand 3, single buffered']
    #allocation8 [shape = 'u8[32768]{0}', space=vmem, size = 0x8000, scoped, tag = 'input window, operand 10, single buffered']
    #allocation9 [shape = 's32[1]{0}', space=sflag, size = 0x4, scoped, tag = 'scoped memory for interaction_network_attention.1']
    #allocation10 [shape = 'u8[32768]{0}', space=vmem, size = 0x8000, scoped, tag = 'input window, operand 12, single buffered']
    #allocation11 [shape = 'u8[32768]{0}', space=vmem, size = 0x8000, scoped, tag = 'input window, operand 16, single buffered']
    #allocation12 [shape = 's32[1]{0}', space=sflag, size = 0x4, scoped, tag = 'scoped memory for interaction_network_attention.1']
    #allocation13 [shape = 'u8[32768]{0}', space=vmem, size = 0x8000, scoped, tag = 'input window, operand 18, single buffered']
    #allocation14 [shape = 'u8[32768]{0}', space=vmem, size = 0x8000, scoped, tag = 'input window, operand 20, single buffered']
    #allocation15 [shape = 's32[1]{0}', space=sflag, size = 0x4, scoped, tag = 'scoped memory for interaction_network_attention.1']
    #allocation16 [shape = 'u8[16384]{0}', space=vmem, size = 0x4000, scoped, tag = 'output window, operand 0, single buffered']
    #allocation17 [shape = 'u8[32768]{0}', space=vmem, size = 0x8000, scoped, tag = 'output window, operand 1, single buffered']
    #allocation18 [shape = 's32[1]{0}', space=sflag, size = 0x4, scoped, tag = 'scoped memory for interaction_network_attention.1']
    %31 = vsyncpa [#allocation3], 0
    %32 = vsyncpa [#allocation6], 0
    %33 = vsyncpa [#allocation9], 0
    %34 = vsyncpa [#allocation12], 0
    %35 = vsyncpa [#allocation15], 0
    %36 = vsyncpa [#allocation4], 0
    %37 = vsyncpa [#allocation18], 0
    // Predicated region
    $region2: #{interaction_network_attention.1} parent=1 // pred_check
      _
    $region3: #{interaction_network_attention.1} parent=1 // pred_check_branch
      %39 = sbr.rel (0) target = $region5
    $region4: #{interaction_network_attention.1} parent=1 // pred_region
      %41 = vsyncadd [#allocation3], 0
      %s42 = sshll.u32 %s0, 4
      %s43 = int_to_ptr.hbm [resolvable:$true] %s42
      %s44 = sshll.u32 [#allocation2], 4
      %s45 = int_to_ptr.vmem [resolvable:$true] %s44
      %50 = dma.hbm_to_vmem [thread:$0]  %s43, 512, %s45, [#allocation3], 128, 128, 8
    $region5: #{interaction_network_attention.1} parent=1 // pred_fallthru
      _
    // Predicated region
    $region6: #{interaction_network_attention.1} parent=1 // pred_check
      _
    $region7: #{interaction_network_attention.1} parent=1 // pred_check_branch
      %52 = sbr.rel (0) target = $region9
    $region8: #{interaction_network_attention.1} parent=1 // pred_region
      _
    $region9: #{interaction_network_attention.1} parent=1 // pred_fallthru
      _
    // Predicated region
    $region10: #{interaction_network_attention.1} parent=1 // pred_check
      _
    $region11: #{interaction_network_attention.1} parent=1 // pred_check_branch
      %54 = sbr.rel (0) target = $region13
    $region12: #{interaction_network_attention.1} parent=1 // pred_region
      %56 = vsyncadd [#allocation6], 0
      %s57 = sshll.u32 %s2, 4
      %s58 = int_to_ptr.hbm [resolvable:$true] %s57
      %s59 = sshll.u32 [#allocation5], 4
      %s60 = int_to_ptr.vmem [resolvable:$true] %s59
      %65 = dma.hbm_to_vmem [thread:$0]  %s58, 3072, %s60, [#allocation6], 192, 192, 12
    $region13: #{interaction_network_attention.1} parent=1 // pred_fallthru
      _
    // Predicated region
    $region14: #{interaction_network_attention.1} parent=1 // pred_check
      _
    $region15: #{interaction_network_attention.1} parent=1 // pred_check_branch
      %67 = sbr.rel (0) target = $region17
    $region16: #{interaction_network_attention.1} parent=1 // pred_region
      %69 = vsyncadd [#allocation6], 0
      %s70 = sshll.u32 %s3, 4
      %s71 = int_to_ptr.hbm [resolvable:$true] %s70
      %s72 = sshll.u32 [#allocation7], 4
      %s73 = int_to_ptr.vmem [resolvable:$true] %s72
      %78 = dma.hbm_to_vmem [thread:$0]  %s71, 3072, %s73, [#allocation6], 192, 192, 12
    $region17: #{interaction_network_attention.1} parent=1 // pred_fallthru
      _
    // Predicated region
    $region18: #{interaction_network_attention.1} parent=1 // pred_check
      _
    $region19: #{interaction_network_attention.1} parent=1 // pred_check_branch
      %80 = sbr.rel (0) target = $region21
    $region20: #{interaction_network_attention.1} parent=1 // pred_region
      _
    $region21: #{interaction_network_attention.1} parent=1 // pred_fallthru
      _
    // Predicated region
    $region22: #{interaction_network_attention.1} parent=1 // pred_check
      _
    $region23: #{interaction_network_attention.1} parent=1 // pred_check_branch
      %82 = sbr.rel (0) target = $region25
    $region24: #{interaction_network_attention.1} parent=1 // pred_region
      _
    $region25: #{interaction_network_attention.1} parent=1 // pred_fallthru
      _
    // Predicated region
    $region26: #{interaction_network_attention.1} parent=1 // pred_check
      _
    $region27: #{interaction_network_attention.1} parent=1 // pred_check_branch
      %84 = sbr.rel (0) target = $region29
    $region28: #{interaction_network_attention.1} parent=1 // pred_region
      _
    $region29: #{interaction_network_attention.1} parent=1 // pred_fallthru
      _
    // Predicated region
    $region30: #{interaction_network_attention.1} parent=1 // pred_check
      _
    $region31: #{interaction_network_attention.1} parent=1 // pred_check_branch
      %86 = sbr.rel (0) target = $region33
    $region32: #{interaction_network_attention.1} parent=1 // pred_region
      _
    $region33: #{interaction_network_attention.1} parent=1 // pred_fallthru
      _
    // Predicated region
    $region34: #{interaction_network_attention.1} parent=1 // pred_check
      _
    $region35: #{interaction_network_attention.1} parent=1 // pred_check_branch
      %88 = sbr.rel (0) target = $region37
    $region36: #{interaction_network_attention.1} parent=1 // pred_region
      _
    $region37: #{interaction_network_attention.1} parent=1 // pred_fallthru
      _
    // Predicated region
    $region38: #{interaction_network_attention.1} parent=1 // pred_check
      _
    $region39: #{interaction_network_attention.1} parent=1 // pred_check_branch
      %90 = sbr.rel (0) target = $region41
    $region40: #{interaction_network_attention.1} parent=1 // pred_region
      _
    $region41: #{interaction_network_attention.1} parent=1 // pred_fallthru
      _
    // Predicated region
    $region42: #{interaction_network_attention.1} parent=1 // pred_check
      _
    $region43: #{interaction_network_attention.1} parent=1 // pred_check_branch
      %92 = sbr.rel (0) target = $region45
    $region44: #{interaction_network_attention.1} parent=1 // pred_region
      %94 = vsyncadd [#allocation9], 0
      %s95 = sshll.u32 %s10, 4
      %s96 = int_to_ptr.hbm [resolvable:$true] %s95
      %s97 = sshll.u32 [#allocation8], 4
      %s98 = int_to_ptr.vmem [resolvable:$true] %s97
      %103 = dma.hbm_to_vmem [thread:$0]  %s96, 1024, %s98, [#allocation9], 64, 64, 4
    $region45: #{interaction_network_attention.1} parent=1 // pred_fallthru
      _
    // Predicated region
    $region46: #{interaction_network_attention.1} parent=1 // pred_check
      _
    $region47: #{interaction_network_attention.1} parent=1 // pred_check_branch
      %105 = sbr.rel (0) target = $region49
    $region48: #{interaction_network_attention.1} parent=1 // pred_region
      _
    $region49: #{interaction_network_attention.1} parent=1 // pred_fallthru
      _
    // Predicated region
    $region50: #{interaction_network_attention.1} parent=1 // pred_check
      _
    $region51: #{interaction_network_attention.1} parent=1 // pred_check_branch
      %107 = sbr.rel (0) target = $region53
    $region52: #{interaction_network_attention.1} parent=1 // pred_region
      %109 = vsyncadd [#allocation9], 0
      %s110 = sshll.u32 %s12, 4
      %s111 = int_to_ptr.hbm [resolvable:$true] %s110
      %s112 = sshll.u32 [#allocation10], 4
      %s113 = int_to_ptr.vmem [resolvable:$true] %s112
      %118 = dma.hbm_to_vmem [thread:$0]  %s111, 1024, %s113, [#allocation9], 64, 64, 4
    $region53: #{interaction_network_attention.1} parent=1 // pred_fallthru
      _
    // Predicated region
    $region54: #{interaction_network_attention.1} parent=1 // pred_check
      _
    $region55: #{interaction_network_attention.1} parent=1 // pred_check_branch
      %120 = sbr.rel (0) target = $region57
    $region56: #{interaction_network_attention.1} parent=1 // pred_region
      _
    $region57: #{interaction_network_attention.1} parent=1 // pred_fallthru
      _
    // Predicated region
    $region58: #{interaction_network_attention.1} parent=1 // pred_check
      _
    $region59: #{interaction_network_attention.1} parent=1 // pred_check_branch
      %122 = sbr.rel (0) target = $region61
    $region60: #{interaction_network_attention.1} parent=1 // pred_region
      _
    $region61: #{interaction_network_attention.1} parent=1 // pred_fallthru
      _
    // Predicated region
    $region62: #{interaction_network_attention.1} parent=1 // pred_check
      _
    $region63: #{interaction_network_attention.1} parent=1 // pred_check_branch
      %124 = sbr.rel (0) target = $region65
    $region64: #{interaction_network_attention.1} parent=1 // pred_region
      _
    $region65: #{interaction_network_attention.1} parent=1 // pred_fallthru
      _
    // Predicated region
    $region66: #{interaction_network_attention.1} parent=1 // pred_check
      _
    $region67: #{interaction_network_attention.1} parent=1 // pred_check_branch
      %126 = sbr.rel (0) target = $region69
    $region68: #{interaction_network_attention.1} parent=1 // pred_region
      %128 = vsyncadd [#allocation12], 0
      %s129 = sshll.u32 %s16, 4
      %s130 = int_to_ptr.hbm [resolvable:$true] %s129
      %s131 = sshll.u32 [#allocation11], 4
      %s132 = int_to_ptr.vmem [resolvable:$true] %s131
      %137 = dma.hbm_to_vmem [thread:$0]  %s130, 1024, %s132, [#allocation12], 64, 64, 4
    $region69: #{interaction_network_attention.1} parent=1 // pred_fallthru
      _
    // Predicated region
    $region70: #{interaction_network_attention.1} parent=1 // pred_check
      _
    $region71: #{interaction_network_attention.1} parent=1 // pred_check_branch
      %139 = sbr.rel (0) target = $region73
    $region72: #{interaction_network_attention.1} parent=1 // pred_region
      _
    $region73: #{interaction_network_attention.1} parent=1 // pred_fallthru
      _
    // Predicated region
    $region74: #{interaction_network_attention.1} parent=1 // pred_check
      _
    $region75: #{interaction_network_attention.1} parent=1 // pred_check_branch
      %141 = sbr.rel (0) target = $region77
    $region76: #{interaction_network_attention.1} parent=1 // pred_region
      %143 = vsyncadd [#allocation12], 0
      %s144 = sshll.u32 %s18, 4
      %s145 = int_to_ptr.hbm [resolvable:$true] %s144
      %s146 = sshll.u32 [#allocation13], 4
      %s147 = int_to_ptr.vmem [resolvable:$true] %s146
      %152 = dma.hbm_to_vmem [thread:$0]  %s145, 1024, %s147, [#allocation12], 64, 64, 4
    $region77: #{interaction_network_attention.1} parent=1 // pred_fallthru
      _
    // Predicated region
    $region78: #{interaction_network_attention.1} parent=1 // pred_check
      _
    $region79: #{interaction_network_attention.1} parent=1 // pred_check_branch
      %154 = sbr.rel (0) target = $region81
    $region80: #{interaction_network_attention.1} parent=1 // pred_region
      _
    $region81: #{interaction_network_attention.1} parent=1 // pred_fallthru
      _
    // Predicated region
    $region82: #{interaction_network_attention.1} parent=1 // pred_check
      _
    $region83: #{interaction_network_attention.1} parent=1 // pred_check_branch
      %156 = sbr.rel (0) target = $region85
    $region84: #{interaction_network_attention.1} parent=1 // pred_region
      %158 = vsyncadd [#allocation15], 0
      %s159 = sshll.u32 %s20, 4
      %s160 = int_to_ptr.hbm [resolvable:$true] %s159
      %s161 = sshll.u32 [#allocation14], 4
      %s162 = int_to_ptr.vmem [resolvable:$true] %s161
      %167 = dma.hbm_to_vmem [thread:$0]  %s160, 1024, %s162, [#allocation15], 64, 64, 4
    $region85: #{interaction_network_attention.1} parent=1 // pred_fallthru
      _
    // Predicated region
    $region86: #{interaction_network_attention.1} parent=1 // pred_check
      _
    $region87: #{interaction_network_attention.1} parent=1 // pred_check_branch
      %169 = sbr.rel (0) target = $region89
    $region88: #{interaction_network_attention.1} parent=1 // pred_region
      _
    $region89: #{interaction_network_attention.1} parent=1 // pred_fallthru
      _
    // Predicated region
    $region90: #{interaction_network_attention.1} parent=1 // pred_check
      _
    $region91: #{interaction_network_attention.1} parent=1 // pred_check_branch
      %171 = sbr.rel (0) target = $region93
    $region92: #{interaction_network_attention.1} parent=1 // pred_region
      _
    $region93: #{interaction_network_attention.1} parent=1 // pred_fallthru
      _
    // Predicated region
    $region94: #{interaction_network_attention.1} parent=1 // pred_check
      _
    $region95: #{interaction_network_attention.1} parent=1 // pred_check_branch
      %173 = sbr.rel (0) target = $region97
    $region96: #{interaction_network_attention.1} parent=1 // pred_region
      _
    $region97: #{interaction_network_attention.1} parent=1 // pred_fallthru
      _
    // Predicated region
    $region98: #{interaction_network_attention.1} parent=1 // pred_check
      _
    $region99: #{interaction_network_attention.1} parent=1 // pred_check_branch
      %175 = sbr.rel (0) target = $region101
    $region100: #{interaction_network_attention.1} parent=1 // pred_region
      %177 = dma.done [#allocation3], 512
    $region101: #{interaction_network_attention.1} parent=1 // pred_fallthru
      _
    // Predicated region
    $region102: #{interaction_network_attention.1} parent=1 // pred_check
      _
    $region103: #{interaction_network_attention.1} parent=1 // pred_check_branch
      %179 = sbr.rel (0) target = $region105
    $region104: #{interaction_network_attention.1} parent=1 // pred_region
      %181 = dma.done [#allocation6], 3072
    $region105: #{interaction_network_attention.1} parent=1 // pred_fallthru
      _
    // Predicated region
    $region106: #{interaction_network_attention.1} parent=1 // pred_check
      _
    $region107: #{interaction_network_attention.1} parent=1 // pred_check_branch
      %183 = sbr.rel (0) target = $region109
    $region108: #{interaction_network_attention.1} parent=1 // pred_region
      %185 = dma.done [#allocation6], 3072
    $region109: #{interaction_network_attention.1} parent=1 // pred_fallthru
      _
    // Predicated region
    $region110: #{interaction_network_attention.1} parent=1 // pred_check
      _
    $region111: #{interaction_network_attention.1} parent=1 // pred_check_branch
      %187 = sbr.rel (0) target = $region113
    $region112: #{interaction_network_attention.1} parent=1 // pred_region
      %189 = dma.done [#allocation9], 1024
    $region113: #{interaction_network_attention.1} parent=1 // pred_fallthru
      _
    // Predicated region
    $region114: #{interaction_network_attention.1} parent=1 // pred_check
      _
    $region115: #{interaction_network_attention.1} parent=1 // pred_check_branch
      %191 = sbr.rel (0) target = $region117
    $region116: #{interaction_network_attention.1} parent=1 // pred_region
      %193 = dma.done [#allocation9], 1024
    $region117: #{interaction_network_attention.1} parent=1 // pred_fallthru
      _
    // Predicated region
    $region118: #{interaction_network_attention.1} parent=1 // pred_check
      _
    $region119: #{interaction_network_attention.1} parent=1 // pred_check_branch
      %195 = sbr.rel (0) target = $region121
    $region120: #{interaction_network_attention.1} parent=1 // pred_region
      %197 = dma.done [#allocation12], 1024
    $region121: #{interaction_network_attention.1} parent=1 // pred_fallthru
      _
    // Predicated region
    $region122: #{interaction_network_attention.1} parent=1 // pred_check
      _
    $region123: #{interaction_network_attention.1} parent=1 // pred_check_branch
      %199 = sbr.rel (0) target = $region125
    $region124: #{interaction_network_attention.1} parent=1 // pred_region
      %201 = dma.done [#allocation12], 1024
    $region125: #{interaction_network_attention.1} parent=1 // pred_fallthru
      _
    // Predicated region
    $region126: #{interaction_network_attention.1} parent=1 // pred_check
      _
    $region127: #{interaction_network_attention.1} parent=1 // pred_check_branch
      %203 = sbr.rel (0) target = $region129
    $region128: #{interaction_network_attention.1} parent=1 // pred_region
      %205 = dma.done [#allocation15], 1024
    $region129: #{interaction_network_attention.1} parent=1 // pred_fallthru
      _
    %v207 = vld [vmem:[#allocation2] sm:$0xff]
    %v208 = vld [vmem:[#allocation2 + $0x8] sm:$0xff]
    %v209 = vld [vmem:[#allocation2 + $0x10] sm:$0xff]
    %v210 = vld [vmem:[#allocation2 + $0x18] sm:$0xff]
    %v211 = vld [vmem:[%s1] sm:$0xff]
    %v212 = vld [vmem:[%s1 + $0x8] sm:$0xff]
    %v213 = vld [vmem:[%s1 + $0x10] sm:$0xff]
    %v214 = vld [vmem:[%s1 + $0x18] sm:$0xff]
    %v215 = vld [vmem:[%s1 + $0x20] sm:$0xff]
    %v216 = vld [vmem:[%s1 + $0x28] sm:$0xff]
    %v217 = vld [vmem:[%s1 + $0x30] sm:$0xff]
    %v218 = vld [vmem:[%s1 + $0x38] sm:$0xff]
    %v219 = vld [vmem:[%s4] sm:$0xf]
    %v220 = vld [vmem:[%s4 + $0x4] sm:$0xf]
    %v221 = vld [vmem:[%s4 + $0x8] sm:$0xf]
    %v222 = vld [vmem:[%s4 + $0xc] sm:$0xf]
    %v223 = vld [vmem:[%s5] sm:$0xf]
    %v224 = vld [vmem:[%s5 + $0x4] sm:$0xf]
    %v225 = vld [vmem:[%s5 + $0x8] sm:$0xf]
    %v226 = vld [vmem:[%s5 + $0xc] sm:$0xf]
    %v227 = vld [vmem:[%s5 + $0x10] sm:$0xf]
    %v228 = vld [vmem:[%s5 + $0x14] sm:$0xf]
    %v229 = vld [vmem:[%s5 + $0x18] sm:$0xf]
    %v230 = vld [vmem:[%s5 + $0x1c] sm:$0xf]
    %v231 = vld [vmem:[%s6] sm:$0xf]
    %v232 = vld [vmem:[%s6 + $0x4] sm:$0xf]
    %v233 = vld [vmem:[%s6 + $0x8] sm:$0xf]
    %v234 = vld [vmem:[%s6 + $0xc] sm:$0xf]
    %v235 = vld [vmem:[%s6 + $0x10] sm:$0xf]
    %v236 = vld [vmem:[%s6 + $0x14] sm:$0xf]
    %v237 = vld [vmem:[%s6 + $0x18] sm:$0xf]
    %v238 = vld [vmem:[%s6 + $0x1c] sm:$0xf]
    %v239 = vld [vmem:[%s7] sm:$0xf]
    %v240 = vld [vmem:[%s7 + $0x4] sm:$0xf]
    %v241 = vld [vmem:[%s7 + $0x8] sm:$0xf]
    %v242 = vld [vmem:[%s7 + $0xc] sm:$0xf]
    %v243 = vld [vmem:[%s7 + $0x10] sm:$0xf]
    %v244 = vld [vmem:[%s7 + $0x14] sm:$0xf]
    %v245 = vld [vmem:[%s7 + $0x18] sm:$0xf]
    %v246 = vld [vmem:[%s7 + $0x1c] sm:$0xf]
    %v247 = vld [vmem:[%s7 + $0x20] sm:$0xf]
    %v248 = vld [vmem:[%s7 + $0x24] sm:$0xf]
    %v249 = vld [vmem:[%s7 + $0x28] sm:$0xf]
    %v250 = vld [vmem:[%s7 + $0x2c] sm:$0xf]
    %v251 = vld [vmem:[%s7 + $0x30] sm:$0xf]
    %v252 = vld [vmem:[%s7 + $0x34] sm:$0xf]
    %v253 = vld [vmem:[%s7 + $0x38] sm:$0xf]
    %v254 = vld [vmem:[%s7 + $0x3c] sm:$0xf]
    %v255 = vld [vmem:[#allocation5] sm:$0xff]
    %v256 = vld [vmem:[#allocation5 + $0x8] sm:$0xf]
    %v257 = vld [vmem:[#allocation5 + $0xc] sm:$0xff]
    %v258 = vld [vmem:[#allocation5 + $0x14] sm:$0xf]
    %v259 = vld [vmem:[#allocation5 + $0x18] sm:$0xff]
    %v260 = vld [vmem:[#allocation5 + $0x20] sm:$0xf]
    %v261 = vld [vmem:[#allocation5 + $0x24] sm:$0xff]
    %v262 = vld [vmem:[#allocation5 + $0x2c] sm:$0xf]
    %v263 = vld [vmem:[#allocation5 + $0x30] sm:$0xff]
    %v264 = vld [vmem:[#allocation5 + $0x38] sm:$0xf]
    %v265 = vld [vmem:[#allocation5 + $0x3c] sm:$0xff]
    %v266 = vld [vmem:[#allocation5 + $0x44] sm:$0xf]
    %v267 = vld [vmem:[#allocation5 + $0x48] sm:$0xff]
    %v268 = vld [vmem:[#allocation5 + $0x50] sm:$0xf]
    %v269 = vld [vmem:[#allocation5 + $0x54] sm:$0xff]
    %v270 = vld [vmem:[#allocation5 + $0x5c] sm:$0xf]
    %v271 = vld [vmem:[#allocation5 + $0x60] sm:$0xff]
    %v272 = vld [vmem:[#allocation5 + $0x68] sm:$0xf]
    %v273 = vld [vmem:[#allocation5 + $0x6c] sm:$0xff]
    %v274 = vld [vmem:[#allocation5 + $0x74] sm:$0xf]
    %v275 = vld [vmem:[#allocation5 + $0x78] sm:$0xff]
    %v276 = vld [vmem:[#allocation5 + $0x80] sm:$0xf]
    %v277 = vld [vmem:[#allocation5 + $0x84] sm:$0xff]
    %v278 = vld [vmem:[#allocation5 + $0x8c] sm:$0xf]
    %v279 = vld [vmem:[#allocation5 + $0x90] sm:$0xff]
    %v280 = vld [vmem:[#allocation5 + $0x98] sm:$0xf]
    %v281 = vld [vmem:[#allocation5 + $0x9c] sm:$0xff]
    %v282 = vld [vmem:[#allocation5 + $0xa4] sm:$0xf]
    %v283 = vld [vmem:[#allocation5 + $0xa8] sm:$0xff]
    %v284 = vld [vmem:[#allocation5 + $0xb0] sm:$0xf]
    %v285 = vld [vmem:[#allocation5 + $0xb4] sm:$0xff]
    %v286 = vld [vmem:[#allocation5 + $0xbc] sm:$0xf]
    %v287 = vpack.c.bf16 %v208, %v207
    %v288 = vpack.c.bf16 %v210, %v209
    %v321 = vunpack.c.l.b16 %v255
    %v322 = vunpack.c.h.b16 %v255
    %v323 = vunpack.c.l.b16 %v256
    %v324 = vunpack.c.l.b16 %v257
    %v325 = vunpack.c.h.b16 %v257
    %v326 = vunpack.c.l.b16 %v258
    %v327 = vunpack.c.l.b16 %v259
    %v328 = vunpack.c.h.b16 %v259
    %v329 = vunpack.c.l.b16 %v260
    %v330 = vunpack.c.l.b16 %v261
    %v331 = vunpack.c.h.b16 %v261
    %v332 = vunpack.c.l.b16 %v262
    %v333 = vunpack.c.l.b16 %v263
    %v334 = vunpack.c.h.b16 %v263
    %v335 = vunpack.c.l.b16 %v264
    %v336 = vunpack.c.l.b16 %v265
    %v337 = vunpack.c.h.b16 %v265
    %v338 = vunpack.c.l.b16 %v266
    %v339 = vunpack.c.l.b16 %v267
    %v340 = vunpack.c.h.b16 %v267
    %v341 = vunpack.c.l.b16 %v268
    %v342 = vunpack.c.l.b16 %v269
    %v343 = vunpack.c.h.b16 %v269
    %v344 = vunpack.c.l.b16 %v270
    %v345 = vunpack.c.l.b16 %v271
    %v346 = vunpack.c.h.b16 %v271
    %v347 = vunpack.c.l.b16 %v272
    %v348 = vunpack.c.l.b16 %v273
    %v349 = vunpack.c.h.b16 %v273
    %v350 = vunpack.c.l.b16 %v274
    %v351 = vunpack.c.l.b16 %v275
    %v352 = vunpack.c.h.b16 %v275
    %v353 = vunpack.c.l.b16 %v276
    %v354 = vunpack.c.l.b16 %v277
    %v355 = vunpack.c.h.b16 %v277
    %v356 = vunpack.c.l.b16 %v278
    %v357 = vunpack.c.l.b16 %v279
    %v358 = vunpack.c.h.b16 %v279
    %v359 = vunpack.c.l.b16 %v280
    %v360 = vunpack.c.l.b16 %v281
    %v361 = vunpack.c.h.b16 %v281
    %v362 = vunpack.c.l.b16 %v282
    %v363 = vunpack.c.l.b16 %v283
    %v364 = vunpack.c.h.b16 %v283
    %v365 = vunpack.c.l.b16 %v284
    %v366 = vunpack.c.l.b16 %v285
    %v367 = vunpack.c.h.b16 %v285
    %v368 = vunpack.c.l.b16 %v286
    %v369 = vpack.c.b16 %v324, %v321
    %v370 = vpack.c.b16 %v325, %v322
    %v371 = vpack.c.b16 %v326, %v323
    %v372 = vpack.c.b16 %v330, %v327
    %v373 = vpack.c.b16 %v331, %v328
    %v374 = vpack.c.b16 %v332, %v329
    %v375 = vpack.c.b16 %v336, %v333
    %v376 = vpack.c.b16 %v337, %v334
    %v377 = vpack.c.b16 %v338, %v335
    %v378 = vpack.c.b16 %v342, %v339
    %v379 = vpack.c.b16 %v343, %v340
    %v380 = vpack.c.b16 %v344, %v341
    %v381 = vpack.c.b16 %v348, %v345
    %v382 = vpack.c.b16 %v349, %v346
    %v383 = vpack.c.b16 %v350, %v347
    %v384 = vpack.c.b16 %v354, %v351
    %v385 = vpack.c.b16 %v355, %v352
    %v386 = vpack.c.b16 %v356, %v353
    %v387 = vpack.c.b16 %v360, %v357
    %v388 = vpack.c.b16 %v361, %v358
    %v389 = vpack.c.b16 %v362, %v359
    %v390 = vpack.c.b16 %v366, %v363
    %v391 = vpack.c.b16 %v367, %v364
    %v392 = vpack.c.b16 %v368, %v365
    %417 = vmatpush.bf16.msra.mxu0 %v390
    %418 = vmatpush.bf16.msra.mxu0 %v387
    %419 = vmatpush.bf16.msra.mxu0 %v384
    %420 = vmatpush.bf16.msra.mxu0 %v381
    %421 = vmatpush.bf16.msra.mxu0 %v378
    %422 = vmatpush.bf16.msra.mxu0 %v375
    %423 = vmatpush.bf16.msra.mxu0 %v372
    %424 = vmatpush.bf16.msra.mxu0 %v369
    %425 = vmatmul.bf16.gmra.mxu0 %v287
    %v426 = vpop.f32.mrf.mxu0
    %v427 = vadd.f32 0.0, %v426
    %v428 = vpop.f32.mrf.mxu0
    %v429 = vadd.f32 0.0, %v428
    %430 = vmatmul.bf16.gmra.mxu0 %v288
    %v431 = vpop.f32.mrf.mxu0
    %v432 = vadd.f32 0.0, %v431
    %v433 = vpop.f32.mrf.mxu0
    %v434 = vadd.f32 0.0, %v433
    %435 = vdwg.mxu0
    %436 = vmatpush.bf16.msra.mxu0 %v391
    %437 = vmatpush.bf16.msra.mxu0 %v388
    %438 = vmatpush.bf16.msra.mxu0 %v385
    %439 = vmatpush.bf16.msra.mxu0 %v382
    %440 = vmatpush.bf16.msra.mxu0 %v379
    %441 = vmatpush.bf16.msra.mxu0 %v376
    %442 = vmatpush.bf16.msra.mxu0 %v373
    %443 = vmatpush.bf16.msra.mxu0 %v370
    %444 = vmatmul.bf16.gmra.mxu0 %v287
    %v445 = vpop.f32.mrf.mxu0
    %v446 = vadd.f32 0.0, %v445
    %v447 = vpop.f32.mrf.mxu0
    %v448 = vadd.f32 0.0, %v447
    %449 = vmatmul.bf16.gmra.mxu0 %v288
    %v450 = vpop.f32.mrf.mxu0
    %v451 = vadd.f32 0.0, %v450
    %v452 = vpop.f32.mrf.mxu0
    %v453 = vadd.f32 0.0, %v452
    %454 = vdwg.mxu0
    %455 = vmatpush.bf16.msra.mxu0 %v392
    %456 = vmatpush.bf16.msra.mxu0 %v389
    %457 = vmatpush.bf16.msra.mxu0 %v386
    %458 = vmatpush.bf16.msra.mxu0 %v383
    %459 = vmatpush.bf16.msra.mxu0 %v380
    %460 = vmatpush.bf16.msra.mxu0 %v377
    %461 = vmatpush.bf16.msra.mxu0 %v374
    %462 = vmatpush.bf16.msra.mxu0 %v371
    %463 = vmatmul.bf16.gmra.mxu0 %v287
    %v464 = vpop.f32.mrf.mxu0
    %v465 = vadd.f32 0.0, %v464
    %v466 = vpop.f32.mrf.mxu0
    %v467 = vadd.f32 0.0, %v466
    %468 = vmatmul.bf16.gmra.mxu0 %v288
    %v469 = vpop.f32.mrf.mxu0
    %v470 = vadd.f32 0.0, %v469
    %v471 = vpop.f32.mrf.mxu0
    %v472 = vadd.f32 0.0, %v471
    %473 = vdwg.mxu0
    %v474 = vld [vmem:[#allocation7] sm:$0xff]
    %v475 = vld [vmem:[#allocation7 + $0x8] sm:$0xf]
    %v476 = vld [vmem:[#allocation7 + $0xc] sm:$0xff]
    %v477 = vld [vmem:[#allocation7 + $0x14] sm:$0xf]
    %v478 = vld [vmem:[#allocation7 + $0x18] sm:$0xff]
    %v479 = vld [vmem:[#allocation7 + $0x20] sm:$0xf]
    %v480 = vld [vmem:[#allocation7 + $0x24] sm:$0xff]
    %v481 = vld [vmem:[#allocation7 + $0x2c] sm:$0xf]
    %v482 = vld [vmem:[#allocation7 + $0x30] sm:$0xff]
    %v483 = vld [vmem:[#allocation7 + $0x38] sm:$0xf]
    %v484 = vld [vmem:[#allocation7 + $0x3c] sm:$0xff]
    %v485 = vld [vmem:[#allocation7 + $0x44] sm:$0xf]
    %v486 = vld [vmem:[#allocation7 + $0x48] sm:$0xff]
    %v487 = vld [vmem:[#allocation7 + $0x50] sm:$0xf]
    %v488 = vld [vmem:[#allocation7 + $0x54] sm:$0xff]
    %v489 = vld [vmem:[#allocation7 + $0x5c] sm:$0xf]
    %v490 = vld [vmem:[#allocation7 + $0x60] sm:$0xff]
    %v491 = vld [vmem:[#allocation7 + $0x68] sm:$0xf]
    %v492 = vld [vmem:[#allocation7 + $0x6c] sm:$0xff]
    %v493 = vld [vmem:[#allocation7 + $0x74] sm:$0xf]
    %v494 = vld [vmem:[#allocation7 + $0x78] sm:$0xff]
    %v495 = vld [vmem:[#allocation7 + $0x80] sm:$0xf]
    %v496 = vld [vmem:[#allocation7 + $0x84] sm:$0xff]
    %v497 = vld [vmem:[#allocation7 + $0x8c] sm:$0xf]
    %v498 = vld [vmem:[#allocation7 + $0x90] sm:$0xff]
    %v499 = vld [vmem:[#allocation7 + $0x98] sm:$0xf]
    %v500 = vld [vmem:[#allocation7 + $0x9c] sm:$0xff]
    %v501 = vld [vmem:[#allocation7 + $0xa4] sm:$0xf]
    %v502 = vld [vmem:[#allocation7 + $0xa8] sm:$0xff]
    %v503 = vld [vmem:[#allocation7 + $0xb0] sm:$0xf]
    %v504 = vld [vmem:[#allocation7 + $0xb4] sm:$0xff]
    %v505 = vld [vmem:[#allocation7 + $0xbc] sm:$0xf]
    %v506 = vpack.c.bf16 %v212, %v211
    %v507 = vpack.c.bf16 %v214, %v213
    %v508 = vpack.c.bf16 %v216, %v215
    %v509 = vpack.c.bf16 %v218, %v217
    %v542 = vunpack.c.l.b16 %v474
    %v543 = vunpack.c.h.b16 %v474
    %v544 = vunpack.c.l.b16 %v475
    %v545 = vunpack.c.l.b16 %v476
    %v546 = vunpack.c.h.b16 %v476
    %v547 = vunpack.c.l.b16 %v477
    %v548 = vunpack.c.l.b16 %v478
    %v549 = vunpack.c.h.b16 %v478
    %v550 = vunpack.c.l.b16 %v479
    %v551 = vunpack.c.l.b16 %v480
    %v552 = vunpack.c.h.b16 %v480
    %v553 = vunpack.c.l.b16 %v481
    %v554 = vunpack.c.l.b16 %v482
    %v555 = vunpack.c.h.b16 %v482
    %v556 = vunpack.c.l.b16 %v483
    %v557 = vunpack.c.l.b16 %v484
    %v558 = vunpack.c.h.b16 %v484
    %v559 = vunpack.c.l.b16 %v485
    %v560 = vunpack.c.l.b16 %v486
    %v561 = vunpack.c.h.b16 %v486
    %v562 = vunpack.c.l.b16 %v487
    %v563 = vunpack.c.l.b16 %v488
    %v564 = vunpack.c.h.b16 %v488
    %v565 = vunpack.c.l.b16 %v489
    %v566 = vunpack.c.l.b16 %v490
    %v567 = vunpack.c.h.b16 %v490
    %v568 = vunpack.c.l.b16 %v491
    %v569 = vunpack.c.l.b16 %v492
    %v570 = vunpack.c.h.b16 %v492
    %v571 = vunpack.c.l.b16 %v493
    %v572 = vunpack.c.l.b16 %v494
    %v573 = vunpack.c.h.b16 %v494
    %v574 = vunpack.c.l.b16 %v495
    %v575 = vunpack.c.l.b16 %v496
    %v576 = vunpack.c.h.b16 %v496
    %v577 = vunpack.c.l.b16 %v497
    %v578 = vunpack.c.l.b16 %v498
    %v579 = vunpack.c.h.b16 %v498
    %v580 = vunpack.c.l.b16 %v499
    %v581 = vunpack.c.l.b16 %v500
    %v582 = vunpack.c.h.b16 %v500
    %v583 = vunpack.c.l.b16 %v501
    %v584 = vunpack.c.l.b16 %v502
    %v585 = vunpack.c.h.b16 %v502
    %v586 = vunpack.c.l.b16 %v503
    %v587 = vunpack.c.l.b16 %v504
    %v588 = vunpack.c.h.b16 %v504
    %v589 = vunpack.c.l.b16 %v505
    %v590 = vpack.c.b16 %v545, %v542
    %v591 = vpack.c.b16 %v546, %v543
    %v592 = vpack.c.b16 %v547, %v544
    %v593 = vpack.c.b16 %v551, %v548
    %v594 = vpack.c.b16 %v552, %v549
    %v595 = vpack.c.b16 %v553, %v550
    %v596 = vpack.c.b16 %v557, %v554
    %v597 = vpack.c.b16 %v558, %v555
    %v598 = vpack.c.b16 %v559, %v556
    %v599 = vpack.c.b16 %v563, %v560
    %v600 = vpack.c.b16 %v564, %v561
    %v601 = vpack.c.b16 %v565, %v562
    %v602 = vpack.c.b16 %v569, %v566
    %v603 = vpack.c.b16 %v570, %v567
    %v604 = vpack.c.b16 %v571, %v568
    %v605 = vpack.c.b16 %v575, %v572
    %v606 = vpack.c.b16 %v576, %v573
    %v607 = vpack.c.b16 %v577, %v574
    %v608 = vpack.c.b16 %v581, %v578
    %v609 = vpack.c.b16 %v582, %v579
    %v610 = vpack.c.b16 %v583, %v580
    %v611 = vpack.c.b16 %v587, %v584
    %v612 = vpack.c.b16 %v588, %v585
    %v613 = vpack.c.b16 %v589, %v586
    %638 = vmatpush.bf16.msra.mxu0 %v611
    %639 = vmatpush.bf16.msra.mxu0 %v608
    %640 = vmatpush.bf16.msra.mxu0 %v605
    %641 = vmatpush.bf16.msra.mxu0 %v602
    %642 = vmatpush.bf16.msra.mxu0 %v599
    %643 = vmatpush.bf16.msra.mxu0 %v596
    %644 = vmatpush.bf16.msra.mxu0 %v593
    %645 = vmatpush.bf16.msra.mxu0 %v590
    %646 = vmatmul.bf16.gmra.mxu0 %v506
    %v647 = vpop.f32.mrf.mxu0
    %v648 = vadd.f32 0.0, %v647
    %v649 = vpop.f32.mrf.mxu0
    %v650 = vadd.f32 0.0, %v649
    %651 = vmatmul.bf16.gmra.mxu0 %v507
    %v652 = vpop.f32.mrf.mxu0
    %v653 = vadd.f32 0.0, %v652
    %v654 = vpop.f32.mrf.mxu0
    %v655 = vadd.f32 0.0, %v654
    %656 = vmatmul.bf16.gmra.mxu0 %v508
    %v657 = vpop.f32.mrf.mxu0
    %v658 = vadd.f32 0.0, %v657
    %v659 = vpop.f32.mrf.mxu0
    %v660 = vadd.f32 0.0, %v659
    %661 = vmatmul.bf16.gmra.mxu0 %v509
    %v662 = vpop.f32.mrf.mxu0
    %v663 = vadd.f32 0.0, %v662
    %v664 = vpop.f32.mrf.mxu0
    %v665 = vadd.f32 0.0, %v664
    %666 = vdwg.mxu0
    %667 = vmatpush.bf16.msra.mxu0 %v612
    %668 = vmatpush.bf16.msra.mxu0 %v609
    %669 = vmatpush.bf16.msra.mxu0 %v606
    %670 = vmatpush.bf16.msra.mxu0 %v603
    %671 = vmatpush.bf16.msra.mxu0 %v600
    %672 = vmatpush.bf16.msra.mxu0 %v597
    %673 = vmatpush.bf16.msra.mxu0 %v594
    %674 = vmatpush.bf16.msra.mxu0 %v591
    %675 = vmatmul.bf16.gmra.mxu0 %v506
    %v676 = vpop.f32.mrf.mxu0
    %v677 = vadd.f32 0.0, %v676
    %v678 = vpop.f32.mrf.mxu0
    %v679 = vadd.f32 0.0, %v678
    %680 = vmatmul.bf16.gmra.mxu0 %v507
    %v681 = vpop.f32.mrf.mxu0
    %v682 = vadd.f32 0.0, %v681
    %v683 = vpop.f32.mrf.mxu0
    %v684 = vadd.f32 0.0, %v683
    %685 = vmatmul.bf16.gmra.mxu0 %v508
    %v686 = vpop.f32.mrf.mxu0
    %v687 = vadd.f32 0.0, %v686
    %v688 = vpop.f32.mrf.mxu0
    %v689 = vadd.f32 0.0, %v688
    %690 = vmatmul.bf16.gmra.mxu0 %v509
    %v691 = vpop.f32.mrf.mxu0
    %v692 = vadd.f32 0.0, %v691
    %v693 = vpop.f32.mrf.mxu0
    %v694 = vadd.f32 0.0, %v693
    %695 = vdwg.mxu0
    %696 = vmatpush.bf16.msra.mxu0 %v613
    %697 = vmatpush.bf16.msra.mxu0 %v610
    %698 = vmatpush.bf16.msra.mxu0 %v607
    %699 = vmatpush.bf16.msra.mxu0 %v604
    %700 = vmatpush.bf16.msra.mxu0 %v601
    %701 = vmatpush.bf16.msra.mxu0 %v598
    %702 = vmatpush.bf16.msra.mxu0 %v595
    %703 = vmatpush.bf16.msra.mxu0 %v592
    %704 = vmatmul.bf16.gmra.mxu0 %v506
    %v705 = vpop.f32.mrf.mxu0
    %v706 = vadd.f32 0.0, %v705
    %v707 = vpop.f32.mrf.mxu0
    %v708 = vadd.f32 0.0, %v707
    %709 = vmatmul.bf16.gmra.mxu0 %v507
    %v710 = vpop.f32.mrf.mxu0
    %v711 = vadd.f32 0.0, %v710
    %v712 = vpop.f32.mrf.mxu0
    %v713 = vadd.f32 0.0, %v712
    %714 = vmatmul.bf16.gmra.mxu0 %v508
    %v715 = vpop.f32.mrf.mxu0
    %v716 = vadd.f32 0.0, %v715
    %v717 = vpop.f32.mrf.mxu0
    %v718 = vadd.f32 0.0, %v717
    %719 = vmatmul.bf16.gmra.mxu0 %v509
    %v720 = vpop.f32.mrf.mxu0
    %v721 = vadd.f32 0.0, %v720
    %v722 = vpop.f32.mrf.mxu0
    %v723 = vadd.f32 0.0, %v722
    %724 = vdwg.mxu0
    %v725 = vpack.c.bf16 %v429, %v427
    %v726 = vpack.c.bf16 %v448, %v446
    %v727 = vpack.c.bf16 %v467, %v465
    %v728 = vpack.c.bf16 %v434, %v432
    %v729 = vpack.c.bf16 %v453, %v451
    %v730 = vpack.c.bf16 %v472, %v470
    %v739 = vunpack.c.l.b16 %v223
    %v740 = vunpack.c.l.b16 %v224
    %v741 = vunpack.c.l.b16 %v225
    %v742 = vunpack.c.l.b16 %v226
    %v743 = vunpack.c.l.b16 %v227
    %v744 = vunpack.c.l.b16 %v228
    %v745 = vunpack.c.l.b16 %v229
    %v746 = vunpack.c.l.b16 %v230
    %v747 = vpack.c.b16 %v740, %v739
    %v748 = vpack.c.b16 %v742, %v741
    %v749 = vpack.c.b16 %v744, %v743
    %v750 = vpack.c.b16 %v746, %v745
    %vm751 = vcmask 261120
    %v753 = vsel %vm751, %v747, 0
    %v756 = vsel %vm751, %v748, 0
    %v759 = vsel %vm751, %v749, 0
    %v762 = vsel %vm751, %v750, 0
    %764 = vmatpush.bf16.msra.mxu0 0
    %765 = vmatpush.bf16.msra.mxu0 0
    %766 = vmatpush.bf16.msra.mxu0 0
    %767 = vmatpush.bf16.msra.mxu0 0
    %768 = vmatpush.bf16.msra.mxu0 0
    %769 = vmatpush.bf16.msra.mxu0 0
    %770 = vmatpush.bf16.msra.mxu0 %v728
    %771 = vmatpush.bf16.msra.mxu0 %v725
    %772 = vmatmul.bf16.gmra.mxu0 %v753
    %v773 = vpop.f32.mrf.mxu0
    %v774 = vadd.f32 0.0, %v773
    %v775 = vpop.f32.mrf.mxu0
    %v776 = vadd.f32 0.0, %v775
    %777 = vmatmul.bf16.gmra.mxu0 %v756
    %v778 = vpop.f32.mrf.mxu0
    %v779 = vadd.f32 0.0, %v778
    %v780 = vpop.f32.mrf.mxu0
    %v781 = vadd.f32 0.0, %v780
    %782 = vmatmul.bf16.gmra.mxu0 %v759
    %v783 = vpop.f32.mrf.mxu0
    %v784 = vadd.f32 0.0, %v783
    %v785 = vpop.f32.mrf.mxu0
    %v786 = vadd.f32 0.0, %v785
    %787 = vmatmul.bf16.gmra.mxu0 %v762
    %v788 = vpop.f32.mrf.mxu0
    %v789 = vadd.f32 0.0, %v788
    %v790 = vpop.f32.mrf.mxu0
    %v791 = vadd.f32 0.0, %v790
    %792 = vdwg.mxu0
    %793 = vmatpush.bf16.msra.mxu0 0
    %794 = vmatpush.bf16.msra.mxu0 0
    %795 = vmatpush.bf16.msra.mxu0 0
    %796 = vmatpush.bf16.msra.mxu0 0
    %797 = vmatpush.bf16.msra.mxu0 0
    %798 = vmatpush.bf16.msra.mxu0 0
    %799 = vmatpush.bf16.msra.mxu0 %v729
    %800 = vmatpush.bf16.msra.mxu0 %v726
    %801 = vmatmul.bf16.gmra.mxu0 %v753
    %v802 = vpop.f32.mrf.mxu0
    %v803 = vadd.f32 0.0, %v802
    %v804 = vpop.f32.mrf.mxu0
    %v805 = vadd.f32 0.0, %v804
    %806 = vmatmul.bf16.gmra.mxu0 %v756
    %v807 = vpop.f32.mrf.mxu0
    %v808 = vadd.f32 0.0, %v807
    %v809 = vpop.f32.mrf.mxu0
    %v810 = vadd.f32 0.0, %v809
    %811 = vmatmul.bf16.gmra.mxu0 %v759
    %v812 = vpop.f32.mrf.mxu0
    %v813 = vadd.f32 0.0, %v812
    %v814 = vpop.f32.mrf.mxu0
    %v815 = vadd.f32 0.0, %v814
    %816 = vmatmul.bf16.gmra.mxu0 %v762
    %v817 = vpop.f32.mrf.mxu0
    %v818 = vadd.f32 0.0, %v817
    %v819 = vpop.f32.mrf.mxu0
    %v820 = vadd.f32 0.0, %v819
    %821 = vdwg.mxu0
    %822 = vmatpush.bf16.msra.mxu0 0
    %823 = vmatpush.bf16.msra.mxu0 0
    %824 = vmatpush.bf16.msra.mxu0 0
    %825 = vmatpush.bf16.msra.mxu0 0
    %826 = vmatpush.bf16.msra.mxu0 0
    %827 = vmatpush.bf16.msra.mxu0 0
    %828 = vmatpush.bf16.msra.mxu0 %v730
    %829 = vmatpush.bf16.msra.mxu0 %v727
    %830 = vmatmul.bf16.gmra.mxu0 %v753
    %v831 = vpop.f32.mrf.mxu0
    %v832 = vadd.f32 0.0, %v831
    %v833 = vpop.f32.mrf.mxu0
    %v834 = vadd.f32 0.0, %v833
    %835 = vmatmul.bf16.gmra.mxu0 %v756
    %v836 = vpop.f32.mrf.mxu0
    %v837 = vadd.f32 0.0, %v836
    %v838 = vpop.f32.mrf.mxu0
    %v839 = vadd.f32 0.0, %v838
    %840 = vmatmul.bf16.gmra.mxu0 %v759
    %v841 = vpop.f32.mrf.mxu0
    %v842 = vadd.f32 0.0, %v841
    %v843 = vpop.f32.mrf.mxu0
    %v844 = vadd.f32 0.0, %v843
    %845 = vmatmul.bf16.gmra.mxu0 %v762
    %v846 = vpop.f32.mrf.mxu0
    %v847 = vadd.f32 0.0, %v846
    %v848 = vpop.f32.mrf.mxu0
    %v849 = vadd.f32 0.0, %v848
    %850 = vdwg.mxu0
    %v859 = vunpack.c.l.b16 %v231
    %v860 = vunpack.c.l.b16 %v232
    %v861 = vunpack.c.l.b16 %v233
    %v862 = vunpack.c.l.b16 %v234
    %v863 = vunpack.c.l.b16 %v235
    %v864 = vunpack.c.l.b16 %v236
    %v865 = vunpack.c.l.b16 %v237
    %v866 = vunpack.c.l.b16 %v238
    %v867 = vpack.c.b16 %v860, %v859
    %v868 = vpack.c.b16 %v862, %v861
    %v869 = vpack.c.b16 %v864, %v863
    %v870 = vpack.c.b16 %v866, %v865
    %v872 = vsel %vm751, %v867, 0
    %v875 = vsel %vm751, %v868, 0
    %v878 = vsel %vm751, %v869, 0
    %v881 = vsel %vm751, %v870, 0
    %883 = vmatpush.bf16.msra.mxu0 0
    %884 = vmatpush.bf16.msra.mxu0 0
    %885 = vmatpush.bf16.msra.mxu0 0
    %886 = vmatpush.bf16.msra.mxu0 0
    %887 = vmatpush.bf16.msra.mxu0 0
    %888 = vmatpush.bf16.msra.mxu0 0
    %889 = vmatpush.bf16.msra.mxu0 %v729
    %890 = vmatpush.bf16.msra.mxu0 %v726
    %891 = vmatmul.bf16.gmra.mxu0 %v872
    %v892 = vpop.f32.mrf.mxu0
    %v893 = vadd.f32 0.0, %v892
    %v894 = vpop.f32.mrf.mxu0
    %v895 = vadd.f32 0.0, %v894
    %896 = vmatmul.bf16.gmra.mxu0 %v875
    %v897 = vpop.f32.mrf.mxu0
    %v898 = vadd.f32 0.0, %v897
    %v899 = vpop.f32.mrf.mxu0
    %v900 = vadd.f32 0.0, %v899
    %901 = vmatmul.bf16.gmra.mxu0 %v878
    %v902 = vpop.f32.mrf.mxu0
    %v903 = vadd.f32 0.0, %v902
    %v904 = vpop.f32.mrf.mxu0
    %v905 = vadd.f32 0.0, %v904
    %906 = vmatmul.bf16.gmra.mxu0 %v881
    %v907 = vpop.f32.mrf.mxu0
    %v908 = vadd.f32 0.0, %v907
    %v909 = vpop.f32.mrf.mxu0
    %v910 = vadd.f32 0.0, %v909
    %911 = vdwg.mxu0
    %912 = vmatpush.bf16.msra.mxu0 0
    %913 = vmatpush.bf16.msra.mxu0 0
    %914 = vmatpush.bf16.msra.mxu0 0
    %915 = vmatpush.bf16.msra.mxu0 0
    %916 = vmatpush.bf16.msra.mxu0 0
    %917 = vmatpush.bf16.msra.mxu0 0
    %918 = vmatpush.bf16.msra.mxu0 %v730
    %919 = vmatpush.bf16.msra.mxu0 %v727
    %920 = vmatmul.bf16.gmra.mxu0 %v872
    %v921 = vpop.f32.mrf.mxu0
    %v922 = vadd.f32 0.0, %v921
    %v923 = vpop.f32.mrf.mxu0
    %v924 = vadd.f32 0.0, %v923
    %925 = vmatmul.bf16.gmra.mxu0 %v875
    %v926 = vpop.f32.mrf.mxu0
    %v927 = vadd.f32 0.0, %v926
    %v928 = vpop.f32.mrf.mxu0
    %v929 = vadd.f32 0.0, %v928
    %930 = vmatmul.bf16.gmra.mxu0 %v878
    %v931 = vpop.f32.mrf.mxu0
    %v932 = vadd.f32 0.0, %v931
    %v933 = vpop.f32.mrf.mxu0
    %v934 = vadd.f32 0.0, %v933
    %935 = vmatmul.bf16.gmra.mxu0 %v881
    %v936 = vpop.f32.mrf.mxu0
    %v937 = vadd.f32 0.0, %v936
    %v938 = vpop.f32.mrf.mxu0
    %v939 = vadd.f32 0.0, %v938
    %940 = vdwg.mxu0
    %v941 = vmul.f32 %v648, %v677
    %v942 = vmul.f32 %v650, %v679
    %v943 = vmul.f32 %v653, %v682
    %v944 = vmul.f32 %v655, %v684
    %v945 = vmul.f32 %v658, %v687
    %v946 = vmul.f32 %v660, %v689
    %v947 = vmul.f32 %v663, %v692
    %v948 = vmul.f32 %v665, %v694
    %v949 = vmul.f32 %v648, %v803
    %v950 = vmul.f32 %v650, %v805
    %v951 = vmul.f32 %v653, %v808
    %v952 = vmul.f32 %v655, %v810
    %v953 = vmul.f32 %v658, %v813
    %v954 = vmul.f32 %v660, %v815
    %v955 = vmul.f32 %v663, %v818
    %v956 = vmul.f32 %v665, %v820
    %v957 = vmul.f32 %v648, %v893
    %v958 = vmul.f32 %v650, %v895
    %v959 = vmul.f32 %v653, %v898
    %v960 = vmul.f32 %v655, %v900
    %v961 = vmul.f32 %v658, %v903
    %v962 = vmul.f32 %v660, %v905
    %v963 = vmul.f32 %v663, %v908
    %v964 = vmul.f32 %v665, %v910
    %v965 = vmul.f32 %v427, %v446
    %v966 = vmul.f32 %v429, %v448
    %v967 = vmul.f32 %v432, %v451
    %v968 = vmul.f32 %v434, %v453
    %v969 = vmul.f32 %v774, %v677
    %v970 = vmul.f32 %v776, %v679
    %v971 = vmul.f32 %v779, %v682
    %v972 = vmul.f32 %v781, %v684
    %v973 = vmul.f32 %v784, %v687
    %v974 = vmul.f32 %v786, %v689
    %v975 = vmul.f32 %v789, %v692
    %v976 = vmul.f32 %v791, %v694
    %v977 = vpack.c.bf16 %v942, %v941
    %v978 = vpack.c.bf16 %v944, %v943
    %v979 = vpack.c.bf16 %v946, %v945
    %v980 = vpack.c.bf16 %v948, %v947
    %v981 = vpack.c.bf16 %v950, %v949
    %v982 = vpack.c.bf16 %v952, %v951
    %v983 = vpack.c.bf16 %v954, %v953
    %v984 = vpack.c.bf16 %v956, %v955
    %v985 = vpack.c.bf16 %v958, %v957
    %v986 = vpack.c.bf16 %v960, %v959
    %v987 = vpack.c.bf16 %v962, %v961
    %v988 = vpack.c.bf16 %v964, %v963
    %v989 = vpack.c.bf16 %v966, %v965
    %v990 = vpack.c.bf16 %v968, %v967
    %v991 = vpack.c.bf16 %v970, %v969
    %v992 = vpack.c.bf16 %v972, %v971
    %v993 = vpack.c.bf16 %v974, %v973
    %v994 = vpack.c.bf16 %v976, %v975
    %v1011 = vunpack.c.l.b16 %v239
    %v1012 = vunpack.c.l.b16 %v240
    %v1013 = vunpack.c.l.b16 %v241
    %v1014 = vunpack.c.l.b16 %v242
    %v1015 = vunpack.c.l.b16 %v243
    %v1016 = vunpack.c.l.b16 %v244
    %v1017 = vunpack.c.l.b16 %v245
    %v1018 = vunpack.c.l.b16 %v246
    %v1019 = vunpack.c.l.b16 %v247
    %v1020 = vunpack.c.l.b16 %v248
    %v1021 = vunpack.c.l.b16 %v249
    %v1022 = vunpack.c.l.b16 %v250
    %v1023 = vunpack.c.l.b16 %v251
    %v1024 = vunpack.c.l.b16 %v252
    %v1025 = vunpack.c.l.b16 %v253
    %v1026 = vunpack.c.l.b16 %v254
    %v1027 = vpack.c.b16 %v1012, %v1011
    %v1028 = vpack.c.b16 %v1014, %v1013
    %v1029 = vpack.c.b16 %v1016, %v1015
    %v1030 = vpack.c.b16 %v1018, %v1017
    %v1031 = vpack.c.b16 %v1020, %v1019
    %v1032 = vpack.c.b16 %v1022, %v1021
    %v1033 = vpack.c.b16 %v1024, %v1023
    %v1034 = vpack.c.b16 %v1026, %v1025
    %1043 = vmatpush.bf16.msra.mxu0 %v1034
    %1044 = vmatpush.bf16.msra.mxu0 %v1033
    %1045 = vmatpush.bf16.msra.mxu0 %v1032
    %1046 = vmatpush.bf16.msra.mxu0 %v1031
    %1047 = vmatpush.bf16.msra.mxu0 %v1030
    %1048 = vmatpush.bf16.msra.mxu0 %v1029
    %1049 = vmatpush.bf16.msra.mxu0 %v1028
    %1050 = vmatpush.bf16.msra.mxu0 %v1027
    %1051 = vmatmul.bf16.gmra.mxu0 %v977
    %v1052 = vpop.f32.mrf.mxu0
    %v1053 = vadd.f32 0.0, %v1052
    %v1054 = vpop.f32.mrf.mxu0
    %v1055 = vadd.f32 0.0, %v1054
    %1056 = vmatmul.bf16.gmra.mxu0 %v978
    %v1057 = vpop.f32.mrf.mxu0
    %v1058 = vadd.f32 0.0, %v1057
    %v1059 = vpop.f32.mrf.mxu0
    %v1060 = vadd.f32 0.0, %v1059
    %1061 = vmatmul.bf16.gmra.mxu0 %v979
    %v1062 = vpop.f32.mrf.mxu0
    %v1063 = vadd.f32 0.0, %v1062
    %v1064 = vpop.f32.mrf.mxu0
    %v1065 = vadd.f32 0.0, %v1064
    %1066 = vmatmul.bf16.gmra.mxu0 %v980
    %v1067 = vpop.f32.mrf.mxu0
    %v1068 = vadd.f32 0.0, %v1067
    %v1069 = vpop.f32.mrf.mxu0
    %v1070 = vadd.f32 0.0, %v1069
    %1071 = vmatmul.bf16.gmra.mxu0 %v981
    %v1072 = vpop.f32.mrf.mxu0
    %v1073 = vadd.f32 0.0, %v1072
    %v1074 = vpop.f32.mrf.mxu0
    %v1075 = vadd.f32 0.0, %v1074
    %1076 = vmatmul.bf16.gmra.mxu0 %v982
    %v1077 = vpop.f32.mrf.mxu0
    %v1078 = vadd.f32 0.0, %v1077
    %v1079 = vpop.f32.mrf.mxu0
    %v1080 = vadd.f32 0.0, %v1079
    %1081 = vmatmul.bf16.gmra.mxu0 %v983
    %v1082 = vpop.f32.mrf.mxu0
    %v1083 = vadd.f32 0.0, %v1082
    %v1084 = vpop.f32.mrf.mxu0
    %v1085 = vadd.f32 0.0, %v1084
    %1086 = vmatmul.bf16.gmra.mxu0 %v984
    %v1087 = vpop.f32.mrf.mxu0
    %v1088 = vadd.f32 0.0, %v1087
    %v1089 = vpop.f32.mrf.mxu0
    %v1090 = vadd.f32 0.0, %v1089
    %1091 = vmatmul.bf16.gmra.mxu0 %v985
    %v1092 = vpop.f32.mrf.mxu0
    %v1093 = vadd.f32 0.0, %v1092
    %v1094 = vpop.f32.mrf.mxu0
    %v1095 = vadd.f32 0.0, %v1094
    %1096 = vmatmul.bf16.gmra.mxu0 %v986
    %v1097 = vpop.f32.mrf.mxu0
    %v1098 = vadd.f32 0.0, %v1097
    %v1099 = vpop.f32.mrf.mxu0
    %v1100 = vadd.f32 0.0, %v1099
    %1101 = vmatmul.bf16.gmra.mxu0 %v987
    %v1102 = vpop.f32.mrf.mxu0
    %v1103 = vadd.f32 0.0, %v1102
    %v1104 = vpop.f32.mrf.mxu0
    %v1105 = vadd.f32 0.0, %v1104
    %1106 = vmatmul.bf16.gmra.mxu0 %v988
    %v1107 = vpop.f32.mrf.mxu0
    %v1108 = vadd.f32 0.0, %v1107
    %v1109 = vpop.f32.mrf.mxu0
    %v1110 = vadd.f32 0.0, %v1109
    %1111 = vmatmul.bf16.gmra.mxu0 %v989
    %v1112 = vpop.f32.mrf.mxu0
    %v1113 = vadd.f32 0.0, %v1112
    %v1114 = vpop.f32.mrf.mxu0
    %v1115 = vadd.f32 0.0, %v1114
    %1116 = vmatmul.bf16.gmra.mxu0 %v990
    %v1117 = vpop.f32.mrf.mxu0
    %v1118 = vadd.f32 0.0, %v1117
    %v1119 = vpop.f32.mrf.mxu0
    %v1120 = vadd.f32 0.0, %v1119
    %1121 = vmatmul.bf16.gmra.mxu0 %v991
    %v1122 = vpop.f32.mrf.mxu0
    %v1123 = vadd.f32 0.0, %v1122
    %v1124 = vpop.f32.mrf.mxu0
    %v1125 = vadd.f32 0.0, %v1124
    %1126 = vmatmul.bf16.gmra.mxu0 %v992
    %v1127 = vpop.f32.mrf.mxu0
    %v1128 = vadd.f32 0.0, %v1127
    %v1129 = vpop.f32.mrf.mxu0
    %v1130 = vadd.f32 0.0, %v1129
    %1131 = vmatmul.bf16.gmra.mxu0 %v993
    %v1132 = vpop.f32.mrf.mxu0
    %v1133 = vadd.f32 0.0, %v1132
    %v1134 = vpop.f32.mrf.mxu0
    %v1135 = vadd.f32 0.0, %v1134
    %1136 = vmatmul.bf16.gmra.mxu0 %v994
    %v1137 = vpop.f32.mrf.mxu0
    %v1138 = vadd.f32 0.0, %v1137
    %v1139 = vpop.f32.mrf.mxu0
    %v1140 = vadd.f32 0.0, %v1139
    %1141 = vdwg.mxu0
    %v1142 = vmax.f32 %v1053, %v1073
    %v1143 = vmax.f32 %v1055, %v1075
    %v1144 = vmax.f32 %v1058, %v1078
    %v1145 = vmax.f32 %v1060, %v1080
    %v1146 = vmax.f32 %v1063, %v1083
    %v1147 = vmax.f32 %v1065, %v1085
    %v1148 = vmax.f32 %v1068, %v1088
    %v1149 = vmax.f32 %v1070, %v1090
    %v1150 = vmax.f32 %v1142, %v1093
    %v1151 = vmax.f32 %v1143, %v1095
    %v1152 = vmax.f32 %v1144, %v1098
    %v1153 = vmax.f32 %v1145, %v1100
    %v1154 = vmax.f32 %v1146, %v1103
    %v1155 = vmax.f32 %v1147, %v1105
    %v1156 = vmax.f32 %v1148, %v1108
    %v1157 = vmax.f32 %v1149, %v1110
    %v1158 = vsub.f32 %v1053, %v1150
    %v1159 = vsub.f32 %v1055, %v1151
    %v1160 = vsub.f32 %v1058, %v1152
    %v1161 = vsub.f32 %v1060, %v1153
    %v1162 = vsub.f32 %v1063, %v1154
    %v1163 = vsub.f32 %v1065, %v1155
    %v1164 = vsub.f32 %v1068, %v1156
    %v1165 = vsub.f32 %v1070, %v1157
    %v1166 = vmul.f32 %v1158, 1.442695
    %v1167 = vpow.pop %v1166
    %v1168 = vmul.f32 %v1159, 1.442695
    %v1169 = vpow.pop %v1168
    %v1170 = vmul.f32 %v1160, 1.442695
    %v1171 = vpow.pop %v1170
    %v1172 = vmul.f32 %v1161, 1.442695
    %v1173 = vpow.pop %v1172
    %v1174 = vmul.f32 %v1162, 1.442695
    %v1175 = vpow.pop %v1174
    %v1176 = vmul.f32 %v1163, 1.442695
    %v1177 = vpow.pop %v1176
    %v1178 = vmul.f32 %v1164, 1.442695
    %v1179 = vpow.pop %v1178
    %v1180 = vmul.f32 %v1165, 1.442695
    %v1181 = vpow.pop %v1180
    %v1182 = vsub.f32 %v1073, %v1150
    %v1183 = vsub.f32 %v1075, %v1151
    %v1184 = vsub.f32 %v1078, %v1152
    %v1185 = vsub.f32 %v1080, %v1153
    %v1186 = vsub.f32 %v1083, %v1154
    %v1187 = vsub.f32 %v1085, %v1155
    %v1188 = vsub.f32 %v1088, %v1156
    %v1189 = vsub.f32 %v1090, %v1157
    %v1190 = vmul.f32 %v1182, 1.442695
    %v1191 = vpow.pop %v1190
    %v1192 = vmul.f32 %v1183, 1.442695
    %v1193 = vpow.pop %v1192
    %v1194 = vmul.f32 %v1184, 1.442695
    %v1195 = vpow.pop %v1194
    %v1196 = vmul.f32 %v1185, 1.442695
    %v1197 = vpow.pop %v1196
    %v1198 = vmul.f32 %v1186, 1.442695
    %v1199 = vpow.pop %v1198
    %v1200 = vmul.f32 %v1187, 1.442695
    %v1201 = vpow.pop %v1200
    %v1202 = vmul.f32 %v1188, 1.442695
    %v1203 = vpow.pop %v1202
    %v1204 = vmul.f32 %v1189, 1.442695
    %v1205 = vpow.pop %v1204
    %v1206 = vsub.f32 %v1093, %v1150
    %v1207 = vsub.f32 %v1095, %v1151
    %v1208 = vsub.f32 %v1098, %v1152
    %v1209 = vsub.f32 %v1100, %v1153
    %v1210 = vsub.f32 %v1103, %v1154
    %v1211 = vsub.f32 %v1105, %v1155
    %v1212 = vsub.f32 %v1108, %v1156
    %v1213 = vsub.f32 %v1110, %v1157
    %v1214 = vmul.f32 %v1206, 1.442695
    %v1215 = vpow.pop %v1214
    %v1216 = vmul.f32 %v1207, 1.442695
    %v1217 = vpow.pop %v1216
    %v1218 = vmul.f32 %v1208, 1.442695
    %v1219 = vpow.pop %v1218
    %v1220 = vmul.f32 %v1209, 1.442695
    %v1221 = vpow.pop %v1220
    %v1222 = vmul.f32 %v1210, 1.442695
    %v1223 = vpow.pop %v1222
    %v1224 = vmul.f32 %v1211, 1.442695
    %v1225 = vpow.pop %v1224
    %v1226 = vmul.f32 %v1212, 1.442695
    %v1227 = vpow.pop %v1226
    %v1228 = vmul.f32 %v1213, 1.442695
    %v1229 = vpow.pop %v1228
    %v1230 = vadd.f32 %v1167, %v1191
    %v1231 = vadd.f32 %v1169, %v1193
    %v1232 = vadd.f32 %v1171, %v1195
    %v1233 = vadd.f32 %v1173, %v1197
    %v1234 = vadd.f32 %v1175, %v1199
    %v1235 = vadd.f32 %v1177, %v1201
    %v1236 = vadd.f32 %v1179, %v1203
    %v1237 = vadd.f32 %v1181, %v1205
    %v1238 = vadd.f32 %v1230, %v1215
    %v1239 = vadd.f32 %v1231, %v1217
    %v1240 = vadd.f32 %v1232, %v1219
    %v1241 = vadd.f32 %v1233, %v1221
    %v1242 = vadd.f32 %v1234, %v1223
    %v1243 = vadd.f32 %v1235, %v1225
    %v1244 = vadd.f32 %v1236, %v1227
    %v1245 = vadd.f32 %v1237, %v1229
    %v1246 = vrcp.pop %v1238
    %v1247 = vrcp.pop %v1239
    %v1248 = vrcp.pop %v1240
    %v1249 = vrcp.pop %v1241
    %v1250 = vrcp.pop %v1242
    %v1251 = vrcp.pop %v1243
    %v1252 = vrcp.pop %v1244
    %v1253 = vrcp.pop %v1245
    %v1254 = vmul.f32 %v1167, %v706
    %v1255 = vmul.f32 %v1169, %v708
    %v1256 = vmul.f32 %v1171, %v711
    %v1257 = vmul.f32 %v1173, %v713
    %v1258 = vmul.f32 %v1175, %v716
    %v1259 = vmul.f32 %v1177, %v718
    %v1260 = vmul.f32 %v1179, %v721
    %v1261 = vmul.f32 %v1181, %v723
    %v1262 = vmul.f32 %v1191, %v832
    %v1263 = vmul.f32 %v1193, %v834
    %v1264 = vmul.f32 %v1195, %v837
    %v1265 = vmul.f32 %v1197, %v839
    %v1266 = vmul.f32 %v1199, %v842
    %v1267 = vmul.f32 %v1201, %v844
    %v1268 = vmul.f32 %v1203, %v847
    %v1269 = vmul.f32 %v1205, %v849
    %v1270 = vadd.f32 %v1254, %v1262
    %v1271 = vadd.f32 %v1255, %v1263
    %v1272 = vadd.f32 %v1256, %v1264
    %v1273 = vadd.f32 %v1257, %v1265
    %v1274 = vadd.f32 %v1258, %v1266
    %v1275 = vadd.f32 %v1259, %v1267
    %v1276 = vadd.f32 %v1260, %v1268
    %v1277 = vadd.f32 %v1261, %v1269
    %v1278 = vmul.f32 %v1215, %v922
    %v1279 = vmul.f32 %v1217, %v924
    %v1280 = vmul.f32 %v1219, %v927
    %v1281 = vmul.f32 %v1221, %v929
    %v1282 = vmul.f32 %v1223, %v932
    %v1283 = vmul.f32 %v1225, %v934
    %v1284 = vmul.f32 %v1227, %v937
    %v1285 = vmul.f32 %v1229, %v939
    %v1286 = vadd.f32 %v1270, %v1278
    %v1287 = vadd.f32 %v1271, %v1279
    %v1288 = vadd.f32 %v1272, %v1280
    %v1289 = vadd.f32 %v1273, %v1281
    %v1290 = vadd.f32 %v1274, %v1282
    %v1291 = vadd.f32 %v1275, %v1283
    %v1292 = vadd.f32 %v1276, %v1284
    %v1293 = vadd.f32 %v1277, %v1285
    %v1294 = vmul.f32 %v1286, %v1246
    %v1295 = vmul.f32 %v1287, %v1247
    %v1296 = vmul.f32 %v1288, %v1248
    %v1297 = vmul.f32 %v1289, %v1249
    %v1298 = vmul.f32 %v1290, %v1250
    %v1299 = vmul.f32 %v1291, %v1251
    %v1300 = vmul.f32 %v1292, %v1252
    %v1301 = vmul.f32 %v1293, %v1253
    %v1302 = vld [vmem:[%s8] sm:$0xf]
    %v1303 = vld [vmem:[%s8 + $0x4] sm:$0xf]
    %v1304 = vld [vmem:[%s8 + $0x8] sm:$0xf]
    %v1305 = vld [vmem:[%s8 + $0xc] sm:$0xf]
    %v1306 = vld [vmem:[%s8 + $0x10] sm:$0xf]
    %v1307 = vld [vmem:[%s8 + $0x14] sm:$0xf]
    %v1308 = vld [vmem:[%s8 + $0x18] sm:$0xf]
    %v1309 = vld [vmem:[%s8 + $0x1c] sm:$0xf]
    %v1310 = vld [vmem:[%s8 + $0x20] sm:$0xf]
    %v1311 = vld [vmem:[%s8 + $0x24] sm:$0xf]
    %v1312 = vld [vmem:[%s8 + $0x28] sm:$0xf]
    %v1313 = vld [vmem:[%s8 + $0x2c] sm:$0xf]
    %v1314 = vld [vmem:[%s8 + $0x30] sm:$0xf]
    %v1315 = vld [vmem:[%s8 + $0x34] sm:$0xf]
    %v1316 = vld [vmem:[%s8 + $0x38] sm:$0xf]
    %v1317 = vld [vmem:[%s8 + $0x3c] sm:$0xf]
    %v1318 = vld [vmem:[%s9] sm:$0x1]
    %v1319 = vld [vmem:[#allocation8] sm:$0xf]
    %v1320 = vld [vmem:[#allocation8 + $0x4] sm:$0xf]
    %v1321 = vld [vmem:[#allocation8 + $0x8] sm:$0xf]
    %v1322 = vld [vmem:[#allocation8 + $0xc] sm:$0xf]
    %v1323 = vld [vmem:[#allocation8 + $0x10] sm:$0xf]
    %v1324 = vld [vmem:[#allocation8 + $0x14] sm:$0xf]
    %v1325 = vld [vmem:[#allocation8 + $0x18] sm:$0xf]
    %v1326 = vld [vmem:[#allocation8 + $0x1c] sm:$0xf]
    %v1327 = vld [vmem:[#allocation8 + $0x20] sm:$0xf]
    %v1328 = vld [vmem:[#allocation8 + $0x24] sm:$0xf]
    %v1329 = vld [vmem:[#allocation8 + $0x28] sm:$0xf]
    %v1330 = vld [vmem:[#allocation8 + $0x2c] sm:$0xf]
    %v1331 = vld [vmem:[#allocation8 + $0x30] sm:$0xf]
    %v1332 = vld [vmem:[#allocation8 + $0x34] sm:$0xf]
    %v1333 = vld [vmem:[#allocation8 + $0x38] sm:$0xf]
    %v1334 = vld [vmem:[#allocation8 + $0x3c] sm:$0xf]
    %v1335 = vld [vmem:[%s11] sm:$0x1]
    %v1336 = vld [vmem:[#allocation10] sm:$0xf]
    %v1337 = vld [vmem:[#allocation10 + $0x4] sm:$0xf]
    %v1338 = vld [vmem:[#allocation10 + $0x8] sm:$0xf]
    %v1339 = vld [vmem:[#allocation10 + $0xc] sm:$0xf]
    %v1340 = vld [vmem:[#allocation10 + $0x10] sm:$0xf]
    %v1341 = vld [vmem:[#allocation10 + $0x14] sm:$0xf]
    %v1342 = vld [vmem:[#allocation10 + $0x18] sm:$0xf]
    %v1343 = vld [vmem:[#allocation10 + $0x1c] sm:$0xf]
    %v1344 = vld [vmem:[#allocation10 + $0x20] sm:$0xf]
    %v1345 = vld [vmem:[#allocation10 + $0x24] sm:$0xf]
    %v1346 = vld [vmem:[#allocation10 + $0x28] sm:$0xf]
    %v1347 = vld [vmem:[#allocation10 + $0x2c] sm:$0xf]
    %v1348 = vld [vmem:[#allocation10 + $0x30] sm:$0xf]
    %v1349 = vld [vmem:[#allocation10 + $0x34] sm:$0xf]
    %v1350 = vld [vmem:[#allocation10 + $0x38] sm:$0xf]
    %v1351 = vld [vmem:[#allocation10 + $0x3c] sm:$0xf]
    %v1352 = vld [vmem:[%s13] sm:$0x1]
    %v1353 = vld [vmem:[%s14] sm:$0x1]
    %v1354 = vld [vmem:[%s15] sm:$0x1]
    %v1355 = vpack.c.bf16 %v1295, %v1294
    %v1356 = vpack.c.bf16 %v1297, %v1296
    %v1357 = vpack.c.bf16 %v1299, %v1298
    %v1358 = vpack.c.bf16 %v1301, %v1300
    %v1360 = vperm.slane %v1318, 0
    %v1378 = vunpack.c.l.b16 %v1302
    %v1379 = vunpack.c.l.b16 %v1303
    %v1380 = vunpack.c.l.b16 %v1304
    %v1381 = vunpack.c.l.b16 %v1305
    %v1382 = vunpack.c.l.b16 %v1306
    %v1383 = vunpack.c.l.b16 %v1307
    %v1384 = vunpack.c.l.b16 %v1308
    %v1385 = vunpack.c.l.b16 %v1309
    %v1386 = vunpack.c.l.b16 %v1310
    %v1387 = vunpack.c.l.b16 %v1311
    %v1388 = vunpack.c.l.b16 %v1312
    %v1389 = vunpack.c.l.b16 %v1313
    %v1390 = vunpack.c.l.b16 %v1314
    %v1391 = vunpack.c.l.b16 %v1315
    %v1392 = vunpack.c.l.b16 %v1316
    %v1393 = vunpack.c.l.b16 %v1317
    %v1394 = vpack.c.b16 %v1379, %v1378
    %v1395 = vpack.c.b16 %v1381, %v1380
    %v1396 = vpack.c.b16 %v1383, %v1382
    %v1397 = vpack.c.b16 %v1385, %v1384
    %v1398 = vpack.c.b16 %v1387, %v1386
    %v1399 = vpack.c.b16 %v1389, %v1388
    %v1400 = vpack.c.b16 %v1391, %v1390
    %v1401 = vpack.c.b16 %v1393, %v1392
    %1410 = vmatpush.bf16.msra.mxu0 %v1401
    %1411 = vmatpush.bf16.msra.mxu0 %v1400
    %1412 = vmatpush.bf16.msra.mxu0 %v1399
    %1413 = vmatpush.bf16.msra.mxu0 %v1398
    %1414 = vmatpush.bf16.msra.mxu0 %v1397
    %1415 = vmatpush.bf16.msra.mxu0 %v1396
    %1416 = vmatpush.bf16.msra.mxu0 %v1395
    %1417 = vmatpush.bf16.msra.mxu0 %v1394
    %1418 = vmatmul.bf16.gmra.mxu0 %v1355
    %v1419 = vpop.f32.mrf.mxu0
    %v1420 = vadd.f32 %v1360, %v1419
    %v1421 = vpop.f32.mrf.mxu0
    %v1422 = vadd.f32 %v1360, %v1421
    %1423 = vmatmul.bf16.gmra.mxu0 %v1356
    %v1424 = vpop.f32.mrf.mxu0
    %v1425 = vadd.f32 %v1360, %v1424
    %v1426 = vpop.f32.mrf.mxu0
    %v1427 = vadd.f32 %v1360, %v1426
    %1428 = vmatmul.bf16.gmra.mxu0 %v1357
    %v1429 = vpop.f32.mrf.mxu0
    %v1430 = vadd.f32 %v1360, %v1429
    %v1431 = vpop.f32.mrf.mxu0
    %v1432 = vadd.f32 %v1360, %v1431
    %1433 = vmatmul.bf16.gmra.mxu0 %v1358
    %v1434 = vpop.f32.mrf.mxu0
    %v1435 = vadd.f32 %v1360, %v1434
    %v1436 = vpop.f32.mrf.mxu0
    %v1437 = vadd.f32 %v1360, %v1436
    %1438 = vdwg.mxu0
    %v1439 = vmax.f32 %v1420, 0.0
    %v1440 = vmax.f32 %v1422, 0.0
    %v1441 = vmax.f32 %v1425, 0.0
    %v1442 = vmax.f32 %v1427, 0.0
    %v1443 = vmax.f32 %v1430, 0.0
    %v1444 = vmax.f32 %v1432, 0.0
    %v1445 = vmax.f32 %v1435, 0.0
    %v1446 = vmax.f32 %v1437, 0.0
    %v1447 = vpack.c.bf16 %v1440, %v1439
    %v1448 = vpack.c.bf16 %v1442, %v1441
    %v1449 = vpack.c.bf16 %v1444, %v1443
    %v1450 = vpack.c.bf16 %v1446, %v1445
    %v1452 = vperm.slane %v1335, 0
    %v1470 = vunpack.c.l.b16 %v1319
    %v1471 = vunpack.c.l.b16 %v1320
    %v1472 = vunpack.c.l.b16 %v1321
    %v1473 = vunpack.c.l.b16 %v1322
    %v1474 = vunpack.c.l.b16 %v1323
    %v1475 = vunpack.c.l.b16 %v1324
    %v1476 = vunpack.c.l.b16 %v1325
    %v1477 = vunpack.c.l.b16 %v1326
    %v1478 = vunpack.c.l.b16 %v1327
    %v1479 = vunpack.c.l.b16 %v1328
    %v1480 = vunpack.c.l.b16 %v1329
    %v1481 = vunpack.c.l.b16 %v1330
    %v1482 = vunpack.c.l.b16 %v1331
    %v1483 = vunpack.c.l.b16 %v1332
    %v1484 = vunpack.c.l.b16 %v1333
    %v1485 = vunpack.c.l.b16 %v1334
    %v1486 = vpack.c.b16 %v1471, %v1470
    %v1487 = vpack.c.b16 %v1473, %v1472
    %v1488 = vpack.c.b16 %v1475, %v1474
    %v1489 = vpack.c.b16 %v1477, %v1476
    %v1490 = vpack.c.b16 %v1479, %v1478
    %v1491 = vpack.c.b16 %v1481, %v1480
    %v1492 = vpack.c.b16 %v1483, %v1482
    %v1493 = vpack.c.b16 %v1485, %v1484
    %1502 = vmatpush.bf16.msra.mxu0 %v1493
    %1503 = vmatpush.bf16.msra.mxu0 %v1492
    %1504 = vmatpush.bf16.msra.mxu0 %v1491
    %1505 = vmatpush.bf16.msra.mxu0 %v1490
    %1506 = vmatpush.bf16.msra.mxu0 %v1489
    %1507 = vmatpush.bf16.msra.mxu0 %v1488
    %1508 = vmatpush.bf16.msra.mxu0 %v1487
    %1509 = vmatpush.bf16.msra.mxu0 %v1486
    %1510 = vmatmul.bf16.gmra.mxu0 %v1447
    %v1511 = vpop.f32.mrf.mxu0
    %v1512 = vadd.f32 %v1452, %v1511
    %v1513 = vpop.f32.mrf.mxu0
    %v1514 = vadd.f32 %v1452, %v1513
    %1515 = vmatmul.bf16.gmra.mxu0 %v1448
    %v1516 = vpop.f32.mrf.mxu0
    %v1517 = vadd.f32 %v1452, %v1516
    %v1518 = vpop.f32.mrf.mxu0
    %v1519 = vadd.f32 %v1452, %v1518
    %1520 = vmatmul.bf16.gmra.mxu0 %v1449
    %v1521 = vpop.f32.mrf.mxu0
    %v1522 = vadd.f32 %v1452, %v1521
    %v1523 = vpop.f32.mrf.mxu0
    %v1524 = vadd.f32 %v1452, %v1523
    %1525 = vmatmul.bf16.gmra.mxu0 %v1450
    %v1526 = vpop.f32.mrf.mxu0
    %v1527 = vadd.f32 %v1452, %v1526
    %v1528 = vpop.f32.mrf.mxu0
    %v1529 = vadd.f32 %v1452, %v1528
    %1530 = vdwg.mxu0
    %v1531 = vmax.f32 %v1512, 0.0
    %v1532 = vmax.f32 %v1514, 0.0
    %v1533 = vmax.f32 %v1517, 0.0
    %v1534 = vmax.f32 %v1519, 0.0
    %v1535 = vmax.f32 %v1522, 0.0
    %v1536 = vmax.f32 %v1524, 0.0
    %v1537 = vmax.f32 %v1527, 0.0
    %v1538 = vmax.f32 %v1529, 0.0
    %v1539 = vpack.c.bf16 %v1532, %v1531
    %v1540 = vpack.c.bf16 %v1534, %v1533
    %v1541 = vpack.c.bf16 %v1536, %v1535
    %v1542 = vpack.c.bf16 %v1538, %v1537
    %v1544 = vperm.slane %v1352, 0
    %v1562 = vunpack.c.l.b16 %v1336
    %v1563 = vunpack.c.l.b16 %v1337
    %v1564 = vunpack.c.l.b16 %v1338
    %v1565 = vunpack.c.l.b16 %v1339
    %v1566 = vunpack.c.l.b16 %v1340
    %v1567 = vunpack.c.l.b16 %v1341
    %v1568 = vunpack.c.l.b16 %v1342
    %v1569 = vunpack.c.l.b16 %v1343
    %v1570 = vunpack.c.l.b16 %v1344
    %v1571 = vunpack.c.l.b16 %v1345
    %v1572 = vunpack.c.l.b16 %v1346
    %v1573 = vunpack.c.l.b16 %v1347
    %v1574 = vunpack.c.l.b16 %v1348
    %v1575 = vunpack.c.l.b16 %v1349
    %v1576 = vunpack.c.l.b16 %v1350
    %v1577 = vunpack.c.l.b16 %v1351
    %v1578 = vpack.c.b16 %v1563, %v1562
    %v1579 = vpack.c.b16 %v1565, %v1564
    %v1580 = vpack.c.b16 %v1567, %v1566
    %v1581 = vpack.c.b16 %v1569, %v1568
    %v1582 = vpack.c.b16 %v1571, %v1570
    %v1583 = vpack.c.b16 %v1573, %v1572
    %v1584 = vpack.c.b16 %v1575, %v1574
    %v1585 = vpack.c.b16 %v1577, %v1576
    %1594 = vmatpush.bf16.msra.mxu0 %v1585
    %1595 = vmatpush.bf16.msra.mxu0 %v1584
    %1596 = vmatpush.bf16.msra.mxu0 %v1583
    %1597 = vmatpush.bf16.msra.mxu0 %v1582
    %1598 = vmatpush.bf16.msra.mxu0 %v1581
    %1599 = vmatpush.bf16.msra.mxu0 %v1580
    %1600 = vmatpush.bf16.msra.mxu0 %v1579
    %1601 = vmatpush.bf16.msra.mxu0 %v1578
    %1602 = vmatmul.bf16.gmra.mxu0 %v1539
    %v1603 = vpop.f32.mrf.mxu0
    %v1604 = vadd.f32 %v1544, %v1603
    %v1605 = vpop.f32.mrf.mxu0
    %v1606 = vadd.f32 %v1544, %v1605
    %1607 = vmatmul.bf16.gmra.mxu0 %v1540
    %v1608 = vpop.f32.mrf.mxu0
    %v1609 = vadd.f32 %v1544, %v1608
    %v1610 = vpop.f32.mrf.mxu0
    %v1611 = vadd.f32 %v1544, %v1610
    %1612 = vmatmul.bf16.gmra.mxu0 %v1541
    %v1613 = vpop.f32.mrf.mxu0
    %v1614 = vadd.f32 %v1544, %v1613
    %v1615 = vpop.f32.mrf.mxu0
    %v1616 = vadd.f32 %v1544, %v1615
    %1617 = vmatmul.bf16.gmra.mxu0 %v1542
    %v1618 = vpop.f32.mrf.mxu0
    %v1619 = vadd.f32 %v1544, %v1618
    %v1620 = vpop.f32.mrf.mxu0
    %v1621 = vadd.f32 %v1544, %v1620
    %1622 = vdwg.mxu0
    %1623 = vadd.xlane.f32.xlu0 %v1604
    %v1624 = vpop.xlane.xlu0 %1623
    %1625 = vadd.xlane.f32.xlu0 %v1606
    %v1626 = vpop.xlane.xlu0 %1625
    %1627 = vadd.xlane.f32.xlu0 %v1609
    %v1628 = vpop.xlane.xlu0 %1627
    %1629 = vadd.xlane.f32.xlu0 %v1611
    %v1630 = vpop.xlane.xlu0 %1629
    %1631 = vadd.xlane.f32.xlu0 %v1614
    %v1632 = vpop.xlane.xlu0 %1631
    %1633 = vadd.xlane.f32.xlu0 %v1616
    %v1634 = vpop.xlane.xlu0 %1633
    %1635 = vadd.xlane.f32.xlu0 %v1619
    %v1636 = vpop.xlane.xlu0 %1635
    %1637 = vadd.xlane.f32.xlu0 %v1621
    %v1638 = vpop.xlane.xlu0 %1637
    %v1639 = vrcp.pop 128.0
    %v1640 = vmul.f32 128.0, %v1639
    %v1641 = vsub.f32 1.0, %v1640
    %v1642 = vmul.f32 %v1639, %v1641
    %v1643 = vadd.f32 %v1639, %v1642
    %vm1644 = vweird.f32 %v1639
    %v1645 = vsel %vm1644, %v1639, %v1643
    %v1646 = vmul.f32 %v1624, %v1645
    %v1647 = vmul.f32 %v1626, %v1645
    %v1648 = vmul.f32 %v1628, %v1645
    %v1649 = vmul.f32 %v1630, %v1645
    %v1650 = vmul.f32 %v1632, %v1645
    %v1651 = vmul.f32 %v1634, %v1645
    %v1652 = vmul.f32 %v1636, %v1645
    %v1653 = vmul.f32 %v1638, %v1645
    %v1654 = vsub.f32 %v1604, %v1646
    %v1655 = vsub.f32 %v1606, %v1647
    %v1656 = vsub.f32 %v1609, %v1648
    %v1657 = vsub.f32 %v1611, %v1649
    %v1658 = vsub.f32 %v1614, %v1650
    %v1659 = vsub.f32 %v1616, %v1651
    %v1660 = vsub.f32 %v1619, %v1652
    %v1661 = vsub.f32 %v1621, %v1653
    %v1662 = vmul.f32 %v1654, %v1654
    %v1663 = vmul.f32 %v1655, %v1655
    %v1664 = vmul.f32 %v1656, %v1656
    %v1665 = vmul.f32 %v1657, %v1657
    %v1666 = vmul.f32 %v1658, %v1658
    %v1667 = vmul.f32 %v1659, %v1659
    %v1668 = vmul.f32 %v1660, %v1660
    %v1669 = vmul.f32 %v1661, %v1661
    %1670 = vadd.xlane.f32.xlu0 %v1662
    %v1671 = vpop.xlane.xlu0 %1670
    %1672 = vadd.xlane.f32.xlu0 %v1663
    %v1673 = vpop.xlane.xlu0 %1672
    %1674 = vadd.xlane.f32.xlu0 %v1664
    %v1675 = vpop.xlane.xlu0 %1674
    %1676 = vadd.xlane.f32.xlu0 %v1665
    %v1677 = vpop.xlane.xlu0 %1676
    %1678 = vadd.xlane.f32.xlu0 %v1666
    %v1679 = vpop.xlane.xlu0 %1678
    %1680 = vadd.xlane.f32.xlu0 %v1667
    %v1681 = vpop.xlane.xlu0 %1680
    %1682 = vadd.xlane.f32.xlu0 %v1668
    %v1683 = vpop.xlane.xlu0 %1682
    %1684 = vadd.xlane.f32.xlu0 %v1669
    %v1685 = vpop.xlane.xlu0 %1684
    %v1686 = vmul.f32 %v1671, %v1645
    %v1687 = vmul.f32 %v1673, %v1645
    %v1688 = vmul.f32 %v1675, %v1645
    %v1689 = vmul.f32 %v1677, %v1645
    %v1690 = vmul.f32 %v1679, %v1645
    %v1691 = vmul.f32 %v1681, %v1645
    %v1692 = vmul.f32 %v1683, %v1645
    %v1693 = vmul.f32 %v1685, %v1645
    %v1694 = vadd.f32 %v1686, 1e-05
    %v1695 = vadd.f32 %v1687, 1e-05
    %v1696 = vadd.f32 %v1688, 1e-05
    %v1697 = vadd.f32 %v1689, 1e-05
    %v1698 = vadd.f32 %v1690, 1e-05
    %v1699 = vadd.f32 %v1691, 1e-05
    %v1700 = vadd.f32 %v1692, 1e-05
    %v1701 = vadd.f32 %v1693, 1e-05
    %v1702 = vrsqrt.pop %v1694
    %v1703 = vmul.f32 %v1702, %v1694
    %v1704 = vmul.f32 %v1703, %v1702
    %v1705 = vmul.f32 0.5, %v1704
    %v1706 = vsub.f32 1.5, %v1705
    %v1707 = vmul.f32 %v1702, %v1706
    %vm1708 = vweird.f32 %v1694
    %vm1709 = vweird.f32 %v1702
    %vm1710 = vmor %vm1708, %vm1709
    %v1711 = vsel %vm1710, %v1702, %v1707
    %v1712 = vrsqrt.pop %v1695
    %v1713 = vmul.f32 %v1712, %v1695
    %v1714 = vmul.f32 %v1713, %v1712
    %v1715 = vmul.f32 0.5, %v1714
    %v1716 = vsub.f32 1.5, %v1715
    %v1717 = vmul.f32 %v1712, %v1716
    %vm1718 = vweird.f32 %v1695
    %vm1719 = vweird.f32 %v1712
    %vm1720 = vmor %vm1718, %vm1719
    %v1721 = vsel %vm1720, %v1712, %v1717
    %v1722 = vrsqrt.pop %v1696
    %v1723 = vmul.f32 %v1722, %v1696
    %v1724 = vmul.f32 %v1723, %v1722
    %v1725 = vmul.f32 0.5, %v1724
    %v1726 = vsub.f32 1.5, %v1725
    %v1727 = vmul.f32 %v1722, %v1726
    %vm1728 = vweird.f32 %v1696
    %vm1729 = vweird.f32 %v1722
    %vm1730 = vmor %vm1728, %vm1729
    %v1731 = vsel %vm1730, %v1722, %v1727
    %v1732 = vrsqrt.pop %v1697
    %v1733 = vmul.f32 %v1732, %v1697
    %v1734 = vmul.f32 %v1733, %v1732
    %v1735 = vmul.f32 0.5, %v1734
    %v1736 = vsub.f32 1.5, %v1735
    %v1737 = vmul.f32 %v1732, %v1736
    %vm1738 = vweird.f32 %v1697
    %vm1739 = vweird.f32 %v1732
    %vm1740 = vmor %vm1738, %vm1739
    %v1741 = vsel %vm1740, %v1732, %v1737
    %v1742 = vrsqrt.pop %v1698
    %v1743 = vmul.f32 %v1742, %v1698
    %v1744 = vmul.f32 %v1743, %v1742
    %v1745 = vmul.f32 0.5, %v1744
    %v1746 = vsub.f32 1.5, %v1745
    %v1747 = vmul.f32 %v1742, %v1746
    %vm1748 = vweird.f32 %v1698
    %vm1749 = vweird.f32 %v1742
    %vm1750 = vmor %vm1748, %vm1749
    %v1751 = vsel %vm1750, %v1742, %v1747
    %v1752 = vrsqrt.pop %v1699
    %v1753 = vmul.f32 %v1752, %v1699
    %v1754 = vmul.f32 %v1753, %v1752
    %v1755 = vmul.f32 0.5, %v1754
    %v1756 = vsub.f32 1.5, %v1755
    %v1757 = vmul.f32 %v1752, %v1756
    %vm1758 = vweird.f32 %v1699
    %vm1759 = vweird.f32 %v1752
    %vm1760 = vmor %vm1758, %vm1759
    %v1761 = vsel %vm1760, %v1752, %v1757
    %v1762 = vrsqrt.pop %v1700
    %v1763 = vmul.f32 %v1762, %v1700
    %v1764 = vmul.f32 %v1763, %v1762
    %v1765 = vmul.f32 0.5, %v1764
    %v1766 = vsub.f32 1.5, %v1765
    %v1767 = vmul.f32 %v1762, %v1766
    %vm1768 = vweird.f32 %v1700
    %vm1769 = vweird.f32 %v1762
    %vm1770 = vmor %vm1768, %vm1769
    %v1771 = vsel %vm1770, %v1762, %v1767
    %v1772 = vrsqrt.pop %v1701
    %v1773 = vmul.f32 %v1772, %v1701
    %v1774 = vmul.f32 %v1773, %v1772
    %v1775 = vmul.f32 0.5, %v1774
    %v1776 = vsub.f32 1.5, %v1775
    %v1777 = vmul.f32 %v1772, %v1776
    %vm1778 = vweird.f32 %v1701
    %vm1779 = vweird.f32 %v1772
    %vm1780 = vmor %vm1778, %vm1779
    %v1781 = vsel %vm1780, %v1772, %v1777
    %v1782 = vmul.f32 %v1654, %v1711
    %v1783 = vmul.f32 %v1655, %v1721
    %v1784 = vmul.f32 %v1656, %v1731
    %v1785 = vmul.f32 %v1657, %v1741
    %v1786 = vmul.f32 %v1658, %v1751
    %v1787 = vmul.f32 %v1659, %v1761
    %v1788 = vmul.f32 %v1660, %v1771
    %v1789 = vmul.f32 %v1661, %v1781
    %v1791 = vperm.slane %v1353, 0
    %v1793 = vmul.f32 %v1782, %v1791
    %v1794 = vmul.f32 %v1783, %v1791
    %v1795 = vmul.f32 %v1784, %v1791
    %v1796 = vmul.f32 %v1785, %v1791
    %v1797 = vmul.f32 %v1786, %v1791
    %v1798 = vmul.f32 %v1787, %v1791
    %v1799 = vmul.f32 %v1788, %v1791
    %v1800 = vmul.f32 %v1789, %v1791
    %v1802 = vperm.slane %v1354, 0
    %v1804 = vadd.f32 %v1793, %v1802
    %v1805 = vadd.f32 %v1794, %v1802
    %v1806 = vadd.f32 %v1795, %v1802
    %v1807 = vadd.f32 %v1796, %v1802
    %v1808 = vadd.f32 %v1797, %v1802
    %v1809 = vadd.f32 %v1798, %v1802
    %v1810 = vadd.f32 %v1799, %v1802
    %v1811 = vadd.f32 %v1800, %v1802
    %v1812 = vadd.f32 %v1804, %v211
    %v1813 = vadd.f32 %v1805, %v212
    %v1814 = vadd.f32 %v1806, %v213
    %v1815 = vadd.f32 %v1807, %v214
    %v1816 = vadd.f32 %v1808, %v215
    %v1817 = vadd.f32 %v1809, %v216
    %v1818 = vadd.f32 %v1810, %v217
    %v1819 = vadd.f32 %v1811, %v218
    %1820 = vst [vmem:[#allocation17] sm:$0xff] %v1812
    %1821 = vst [vmem:[#allocation17 + $0x8] sm:$0xff] %v1813
    %1822 = vst [vmem:[#allocation17 + $0x10] sm:$0xff] %v1814
    %1823 = vst [vmem:[#allocation17 + $0x18] sm:$0xff] %v1815
    %1824 = vst [vmem:[#allocation17 + $0x20] sm:$0xff] %v1816
    %1825 = vst [vmem:[#allocation17 + $0x28] sm:$0xff] %v1817
    %1826 = vst [vmem:[#allocation17 + $0x30] sm:$0xff] %v1818
    %1827 = vst [vmem:[#allocation17 + $0x38] sm:$0xff] %v1819
    %v1828 = vmax.f32 %v1123, %v1133
    %v1829 = vmax.f32 %v1125, %v1135
    %v1830 = vmax.f32 %v1128, %v1138
    %v1831 = vmax.f32 %v1130, %v1140
    %v1832 = vmax.f32 %v1828, %v1829
    %v1833 = vmax.f32 %v1830, %v1831
    %v1834 = vmax.f32 %v1832, %v1833
    %v1835 = vrot.slane %v1834, 4
    %v1836 = vmax.f32 %v1834, %v1835
    %v1837 = vrot.slane %v1836, 2
    %v1838 = vmax.f32 %v1836, %v1837
    %v1839 = vrot.slane %v1838, 1
    %v1840 = vmax.f32 %v1838, %v1839
    %v1841 = vmax.f32 %v1113, %v1840
    %v1842 = vmax.f32 %v1115, %v1840
    %v1843 = vmax.f32 %v1118, %v1840
    %v1844 = vmax.f32 %v1120, %v1840
    %v1845 = vpack.c.bf16 %v1842, %v1841
    %v1846 = vpack.c.bf16 %v1844, %v1843
    %1847 = vmatpush.bf16.msra.mxu0 0
    %1848 = vmatpush.bf16.msra.mxu0 0
    %1849 = vmatpush.bf16.msra.mxu0 0
    %1850 = vmatpush.bf16.msra.mxu0 0
    %1851 = vmatpush.bf16.msra.mxu0 0
    %1852 = vmatpush.bf16.msra.mxu0 0
    %1853 = vmatpush.bf16.msra.mxu0 %v1846
    %1854 = vmatpush.bf16.msra.mxu0 %v1845
    %1855 = vmatmul.bf16.gmra.mxu0 %v753
    %v1856 = vpop.f32.mrf.mxu0
    %v1857 = vadd.f32 0.0, %v1856
    %v1858 = vpop.f32.mrf.mxu0
    %v1859 = vadd.f32 0.0, %v1858
    %1860 = vmatmul.bf16.gmra.mxu0 %v756
    %v1861 = vpop.f32.mrf.mxu0
    %v1862 = vadd.f32 0.0, %v1861
    %v1863 = vpop.f32.mrf.mxu0
    %v1864 = vadd.f32 0.0, %v1863
    %1865 = vmatmul.bf16.gmra.mxu0 %v759
    %v1866 = vpop.f32.mrf.mxu0
    %v1867 = vadd.f32 0.0, %v1866
    %v1868 = vpop.f32.mrf.mxu0
    %v1869 = vadd.f32 0.0, %v1868
    %1870 = vmatmul.bf16.gmra.mxu0 %v762
    %v1871 = vpop.f32.mrf.mxu0
    %v1872 = vadd.f32 0.0, %v1871
    %v1873 = vpop.f32.mrf.mxu0
    %v1874 = vadd.f32 0.0, %v1873
    %1875 = vdwg.mxu0
    %v1876 = vsub.f32 %v1113, %v1841
    %v1877 = vsub.f32 %v1115, %v1842
    %v1878 = vsub.f32 %v1118, %v1843
    %v1879 = vsub.f32 %v1120, %v1844
    %v1880 = vmul.f32 %v1876, 1.442695
    %v1881 = vpow.pop %v1880
    %v1882 = vmul.f32 %v1877, 1.442695
    %v1883 = vpow.pop %v1882
    %v1884 = vmul.f32 %v1878, 1.442695
    %v1885 = vpow.pop %v1884
    %v1886 = vmul.f32 %v1879, 1.442695
    %v1887 = vpow.pop %v1886
    %v1888 = vsub.f32 %v1123, %v1857
    %v1889 = vsub.f32 %v1125, %v1859
    %v1890 = vsub.f32 %v1128, %v1862
    %v1891 = vsub.f32 %v1130, %v1864
    %v1892 = vsub.f32 %v1133, %v1867
    %v1893 = vsub.f32 %v1135, %v1869
    %v1894 = vsub.f32 %v1138, %v1872
    %v1895 = vsub.f32 %v1140, %v1874
    %v1896 = vmul.f32 %v1888, 1.442695
    %v1897 = vpow.pop %v1896
    %v1898 = vmul.f32 %v1889, 1.442695
    %v1899 = vpow.pop %v1898
    %v1900 = vmul.f32 %v1890, 1.442695
    %v1901 = vpow.pop %v1900
    %v1902 = vmul.f32 %v1891, 1.442695
    %v1903 = vpow.pop %v1902
    %v1904 = vmul.f32 %v1892, 1.442695
    %v1905 = vpow.pop %v1904
    %v1906 = vmul.f32 %v1893, 1.442695
    %v1907 = vpow.pop %v1906
    %v1908 = vmul.f32 %v1894, 1.442695
    %v1909 = vpow.pop %v1908
    %v1910 = vmul.f32 %v1895, 1.442695
    %v1911 = vpow.pop %v1910
    %v1912 = vpack.c.bf16 %v1899, %v1897
    %v1913 = vpack.c.bf16 %v1903, %v1901
    %v1914 = vpack.c.bf16 %v1907, %v1905
    %v1915 = vpack.c.bf16 %v1911, %v1909
    %v1920 = vunpack.c.l.b16 %v219
    %v1921 = vunpack.c.l.b16 %v220
    %v1922 = vunpack.c.l.b16 %v221
    %v1923 = vunpack.c.l.b16 %v222
    %v1924 = vpack.c.b16 %v1921, %v1920
    %v1925 = vpack.c.b16 %v1923, %v1922
    %vm1926 = vcmask 523264
    %v1928 = vsel %vm1926, %v1924, 0
    %v1931 = vsel %vm1926, %v1925, 0
    %1933 = vmatpush.bf16.msra.mxu0 0
    %1934 = vmatpush.bf16.msra.mxu0 0
    %1935 = vmatpush.bf16.msra.mxu0 0
    %1936 = vmatpush.bf16.msra.mxu0 0
    %1937 = vmatpush.bf16.msra.mxu0 %v1915
    %1938 = vmatpush.bf16.msra.mxu0 %v1914
    %1939 = vmatpush.bf16.msra.mxu0 %v1913
    %1940 = vmatpush.bf16.msra.mxu0 %v1912
    %1941 = vmatmul.bf16.gmra.mxu0 %v1928
    %v1942 = vpop.f32.mrf.mxu0
    %v1943 = vadd.f32 0.0, %v1942
    %v1944 = vpop.f32.mrf.mxu0
    %v1945 = vadd.f32 0.0, %v1944
    %1946 = vmatmul.bf16.gmra.mxu0 %v1931
    %v1947 = vpop.f32.mrf.mxu0
    %v1948 = vadd.f32 0.0, %v1947
    %v1949 = vpop.f32.mrf.mxu0
    %v1950 = vadd.f32 0.0, %v1949
    %1951 = vdwg.mxu0
    %v1952 = vadd.f32 %v1881, %v1943
    %v1953 = vadd.f32 %v1883, %v1945
    %v1954 = vadd.f32 %v1885, %v1948
    %v1955 = vadd.f32 %v1887, %v1950
    %v1956 = vrcp.pop %v1952
    %v1957 = vrcp.pop %v1953
    %v1958 = vrcp.pop %v1954
    %v1959 = vrcp.pop %v1955
    %v1960 = vmul.f32 %v1881, %v1956
    %v1961 = vmul.f32 %v1883, %v1957
    %v1962 = vmul.f32 %v1885, %v1958
    %v1963 = vmul.f32 %v1887, %v1959
    %v1964 = vpack.c.bf16 %v1953, %v1952
    %v1965 = vpack.c.bf16 %v1955, %v1954
    %1966 = vmatpush.bf16.msra.mxu0 0
    %1967 = vmatpush.bf16.msra.mxu0 0
    %1968 = vmatpush.bf16.msra.mxu0 0
    %1969 = vmatpush.bf16.msra.mxu0 0
    %1970 = vmatpush.bf16.msra.mxu0 0
    %1971 = vmatpush.bf16.msra.mxu0 0
    %1972 = vmatpush.bf16.msra.mxu0 %v1965
    %1973 = vmatpush.bf16.msra.mxu0 %v1964
    %1974 = vmatmul.bf16.gmra.mxu0 %v753
    %v1975 = vpop.f32.mrf.mxu0
    %v1976 = vadd.f32 0.0, %v1975
    %v1977 = vpop.f32.mrf.mxu0
    %v1978 = vadd.f32 0.0, %v1977
    %1979 = vmatmul.bf16.gmra.mxu0 %v756
    %v1980 = vpop.f32.mrf.mxu0
    %v1981 = vadd.f32 0.0, %v1980
    %v1982 = vpop.f32.mrf.mxu0
    %v1983 = vadd.f32 0.0, %v1982
    %1984 = vmatmul.bf16.gmra.mxu0 %v759
    %v1985 = vpop.f32.mrf.mxu0
    %v1986 = vadd.f32 0.0, %v1985
    %v1987 = vpop.f32.mrf.mxu0
    %v1988 = vadd.f32 0.0, %v1987
    %1989 = vmatmul.bf16.gmra.mxu0 %v762
    %v1990 = vpop.f32.mrf.mxu0
    %v1991 = vadd.f32 0.0, %v1990
    %v1992 = vpop.f32.mrf.mxu0
    %v1993 = vadd.f32 0.0, %v1992
    %1994 = vdwg.mxu0
    %v1995 = vrcp.pop %v1976
    %v1996 = vrcp.pop %v1978
    %v1997 = vrcp.pop %v1981
    %v1998 = vrcp.pop %v1983
    %v1999 = vrcp.pop %v1986
    %v2000 = vrcp.pop %v1988
    %v2001 = vrcp.pop %v1991
    %v2002 = vrcp.pop %v1993
    %v2003 = vmul.f32 %v1897, %v1995
    %v2004 = vmul.f32 %v1899, %v1996
    %v2005 = vmul.f32 %v1901, %v1997
    %v2006 = vmul.f32 %v1903, %v1998
    %v2007 = vmul.f32 %v1905, %v1999
    %v2008 = vmul.f32 %v1907, %v2000
    %v2009 = vmul.f32 %v1909, %v2001
    %v2010 = vmul.f32 %v1911, %v2002
    %v2011 = vmul.f32 %v1960, %v465
    %v2012 = vmul.f32 %v1961, %v467
    %v2013 = vmul.f32 %v1962, %v470
    %v2014 = vmul.f32 %v1963, %v472
    %v2015 = vmul.f32 %v2003, %v706
    %v2016 = vmul.f32 %v2004, %v708
    %v2017 = vmul.f32 %v2005, %v711
    %v2018 = vmul.f32 %v2006, %v713
    %v2019 = vmul.f32 %v2007, %v716
    %v2020 = vmul.f32 %v2008, %v718
    %v2021 = vmul.f32 %v2009, %v721
    %v2022 = vmul.f32 %v2010, %v723
    %v2023 = vpack.c.bf16 %v2016, %v2015
    %v2024 = vpack.c.bf16 %v2018, %v2017
    %v2025 = vpack.c.bf16 %v2020, %v2019
    %v2026 = vpack.c.bf16 %v2022, %v2021
    %2027 = vmatpush.bf16.msra.mxu0 0
    %2028 = vmatpush.bf16.msra.mxu0 0
    %2029 = vmatpush.bf16.msra.mxu0 0
    %2030 = vmatpush.bf16.msra.mxu0 0
    %2031 = vmatpush.bf16.msra.mxu0 %v2026
    %2032 = vmatpush.bf16.msra.mxu0 %v2025
    %2033 = vmatpush.bf16.msra.mxu0 %v2024
    %2034 = vmatpush.bf16.msra.mxu0 %v2023
    %2035 = vmatmul.bf16.gmra.mxu0 %v1928
    %v2036 = vpop.f32.mrf.mxu0
    %v2037 = vadd.f32 0.0, %v2036
    %v2038 = vpop.f32.mrf.mxu0
    %v2039 = vadd.f32 0.0, %v2038
    %2040 = vmatmul.bf16.gmra.mxu0 %v1931
    %v2041 = vpop.f32.mrf.mxu0
    %v2042 = vadd.f32 0.0, %v2041
    %v2043 = vpop.f32.mrf.mxu0
    %v2044 = vadd.f32 0.0, %v2043
    %2045 = vdwg.mxu0
    %v2046 = vadd.f32 %v2011, %v2037
    %v2047 = vadd.f32 %v2012, %v2039
    %v2048 = vadd.f32 %v2013, %v2042
    %v2049 = vadd.f32 %v2014, %v2044
    %v2050 = vld [vmem:[#allocation11] sm:$0xf]
    %v2051 = vld [vmem:[#allocation11 + $0x4] sm:$0xf]
    %v2052 = vld [vmem:[#allocation11 + $0x8] sm:$0xf]
    %v2053 = vld [vmem:[#allocation11 + $0xc] sm:$0xf]
    %v2054 = vld [vmem:[#allocation11 + $0x10] sm:$0xf]
    %v2055 = vld [vmem:[#allocation11 + $0x14] sm:$0xf]
    %v2056 = vld [vmem:[#allocation11 + $0x18] sm:$0xf]
    %v2057 = vld [vmem:[#allocation11 + $0x1c] sm:$0xf]
    %v2058 = vld [vmem:[#allocation11 + $0x20] sm:$0xf]
    %v2059 = vld [vmem:[#allocation11 + $0x24] sm:$0xf]
    %v2060 = vld [vmem:[#allocation11 + $0x28] sm:$0xf]
    %v2061 = vld [vmem:[#allocation11 + $0x2c] sm:$0xf]
    %v2062 = vld [vmem:[#allocation11 + $0x30] sm:$0xf]
    %v2063 = vld [vmem:[#allocation11 + $0x34] sm:$0xf]
    %v2064 = vld [vmem:[#allocation11 + $0x38] sm:$0xf]
    %v2065 = vld [vmem:[#allocation11 + $0x3c] sm:$0xf]
    %v2066 = vld [vmem:[%s17] sm:$0x1]
    %v2067 = vld [vmem:[#allocation13] sm:$0xf]
    %v2068 = vld [vmem:[#allocation13 + $0x4] sm:$0xf]
    %v2069 = vld [vmem:[#allocation13 + $0x8] sm:$0xf]
    %v2070 = vld [vmem:[#allocation13 + $0xc] sm:$0xf]
    %v2071 = vld [vmem:[#allocation13 + $0x10] sm:$0xf]
    %v2072 = vld [vmem:[#allocation13 + $0x14] sm:$0xf]
    %v2073 = vld [vmem:[#allocation13 + $0x18] sm:$0xf]
    %v2074 = vld [vmem:[#allocation13 + $0x1c] sm:$0xf]
    %v2075 = vld [vmem:[#allocation13 + $0x20] sm:$0xf]
    %v2076 = vld [vmem:[#allocation13 + $0x24] sm:$0xf]
    %v2077 = vld [vmem:[#allocation13 + $0x28] sm:$0xf]
    %v2078 = vld [vmem:[#allocation13 + $0x2c] sm:$0xf]
    %v2079 = vld [vmem:[#allocation13 + $0x30] sm:$0xf]
    %v2080 = vld [vmem:[#allocation13 + $0x34] sm:$0xf]
    %v2081 = vld [vmem:[#allocation13 + $0x38] sm:$0xf]
    %v2082 = vld [vmem:[#allocation13 + $0x3c] sm:$0xf]
    %v2083 = vld [vmem:[%s19] sm:$0x1]
    %v2084 = vld [vmem:[#allocation14] sm:$0xf]
    %v2085 = vld [vmem:[#allocation14 + $0x4] sm:$0xf]
    %v2086 = vld [vmem:[#allocation14 + $0x8] sm:$0xf]
    %v2087 = vld [vmem:[#allocation14 + $0xc] sm:$0xf]
    %v2088 = vld [vmem:[#allocation14 + $0x10] sm:$0xf]
    %v2089 = vld [vmem:[#allocation14 + $0x14] sm:$0xf]
    %v2090 = vld [vmem:[#allocation14 + $0x18] sm:$0xf]
    %v2091 = vld [vmem:[#allocation14 + $0x1c] sm:$0xf]
    %v2092 = vld [vmem:[#allocation14 + $0x20] sm:$0xf]
    %v2093 = vld [vmem:[#allocation14 + $0x24] sm:$0xf]
    %v2094 = vld [vmem:[#allocation14 + $0x28] sm:$0xf]
    %v2095 = vld [vmem:[#allocation14 + $0x2c] sm:$0xf]
    %v2096 = vld [vmem:[#allocation14 + $0x30] sm:$0xf]
    %v2097 = vld [vmem:[#allocation14 + $0x34] sm:$0xf]
    %v2098 = vld [vmem:[#allocation14 + $0x38] sm:$0xf]
    %v2099 = vld [vmem:[#allocation14 + $0x3c] sm:$0xf]
    %v2100 = vld [vmem:[%s21] sm:$0x1]
    %v2101 = vld [vmem:[%s22] sm:$0x1]
    %v2102 = vld [vmem:[%s23] sm:$0x1]
    %v2103 = vpack.c.bf16 %v2047, %v2046
    %v2104 = vpack.c.bf16 %v2049, %v2048
    %v2106 = vperm.slane %v2066, 0
    %v2124 = vunpack.c.l.b16 %v2050
    %v2125 = vunpack.c.l.b16 %v2051
    %v2126 = vunpack.c.l.b16 %v2052
    %v2127 = vunpack.c.l.b16 %v2053
    %v2128 = vunpack.c.l.b16 %v2054
    %v2129 = vunpack.c.l.b16 %v2055
    %v2130 = vunpack.c.l.b16 %v2056
    %v2131 = vunpack.c.l.b16 %v2057
    %v2132 = vunpack.c.l.b16 %v2058
    %v2133 = vunpack.c.l.b16 %v2059
    %v2134 = vunpack.c.l.b16 %v2060
    %v2135 = vunpack.c.l.b16 %v2061
    %v2136 = vunpack.c.l.b16 %v2062
    %v2137 = vunpack.c.l.b16 %v2063
    %v2138 = vunpack.c.l.b16 %v2064
    %v2139 = vunpack.c.l.b16 %v2065
    %v2140 = vpack.c.b16 %v2125, %v2124
    %v2141 = vpack.c.b16 %v2127, %v2126
    %v2142 = vpack.c.b16 %v2129, %v2128
    %v2143 = vpack.c.b16 %v2131, %v2130
    %v2144 = vpack.c.b16 %v2133, %v2132
    %v2145 = vpack.c.b16 %v2135, %v2134
    %v2146 = vpack.c.b16 %v2137, %v2136
    %v2147 = vpack.c.b16 %v2139, %v2138
    %2156 = vmatpush.bf16.msra.mxu0 %v2147
    %2157 = vmatpush.bf16.msra.mxu0 %v2146
    %2158 = vmatpush.bf16.msra.mxu0 %v2145
    %2159 = vmatpush.bf16.msra.mxu0 %v2144
    %2160 = vmatpush.bf16.msra.mxu0 %v2143
    %2161 = vmatpush.bf16.msra.mxu0 %v2142
    %2162 = vmatpush.bf16.msra.mxu0 %v2141
    %2163 = vmatpush.bf16.msra.mxu0 %v2140
    %2164 = vmatmul.bf16.gmra.mxu0 %v2103
    %v2165 = vpop.f32.mrf.mxu0
    %v2166 = vadd.f32 %v2106, %v2165
    %v2167 = vpop.f32.mrf.mxu0
    %v2168 = vadd.f32 %v2106, %v2167
    %2169 = vmatmul.bf16.gmra.mxu0 %v2104
    %v2170 = vpop.f32.mrf.mxu0
    %v2171 = vadd.f32 %v2106, %v2170
    %v2172 = vpop.f32.mrf.mxu0
    %v2173 = vadd.f32 %v2106, %v2172
    %2174 = vdwg.mxu0
    %v2175 = vmax.f32 %v2166, 0.0
    %v2176 = vmax.f32 %v2168, 0.0
    %v2177 = vmax.f32 %v2171, 0.0
    %v2178 = vmax.f32 %v2173, 0.0
    %v2179 = vpack.c.bf16 %v2176, %v2175
    %v2180 = vpack.c.bf16 %v2178, %v2177
    %v2182 = vperm.slane %v2083, 0
    %v2200 = vunpack.c.l.b16 %v2067
    %v2201 = vunpack.c.l.b16 %v2068
    %v2202 = vunpack.c.l.b16 %v2069
    %v2203 = vunpack.c.l.b16 %v2070
    %v2204 = vunpack.c.l.b16 %v2071
    %v2205 = vunpack.c.l.b16 %v2072
    %v2206 = vunpack.c.l.b16 %v2073
    %v2207 = vunpack.c.l.b16 %v2074
    %v2208 = vunpack.c.l.b16 %v2075
    %v2209 = vunpack.c.l.b16 %v2076
    %v2210 = vunpack.c.l.b16 %v2077
    %v2211 = vunpack.c.l.b16 %v2078
    %v2212 = vunpack.c.l.b16 %v2079
    %v2213 = vunpack.c.l.b16 %v2080
    %v2214 = vunpack.c.l.b16 %v2081
    %v2215 = vunpack.c.l.b16 %v2082
    %v2216 = vpack.c.b16 %v2201, %v2200
    %v2217 = vpack.c.b16 %v2203, %v2202
    %v2218 = vpack.c.b16 %v2205, %v2204
    %v2219 = vpack.c.b16 %v2207, %v2206
    %v2220 = vpack.c.b16 %v2209, %v2208
    %v2221 = vpack.c.b16 %v2211, %v2210
    %v2222 = vpack.c.b16 %v2213, %v2212
    %v2223 = vpack.c.b16 %v2215, %v2214
    %2232 = vmatpush.bf16.msra.mxu0 %v2223
    %2233 = vmatpush.bf16.msra.mxu0 %v2222
    %2234 = vmatpush.bf16.msra.mxu0 %v2221
    %2235 = vmatpush.bf16.msra.mxu0 %v2220
    %2236 = vmatpush.bf16.msra.mxu0 %v2219
    %2237 = vmatpush.bf16.msra.mxu0 %v2218
    %2238 = vmatpush.bf16.msra.mxu0 %v2217
    %2239 = vmatpush.bf16.msra.mxu0 %v2216
    %2240 = vmatmul.bf16.gmra.mxu0 %v2179
    %v2241 = vpop.f32.mrf.mxu0
    %v2242 = vadd.f32 %v2182, %v2241
    %v2243 = vpop.f32.mrf.mxu0
    %v2244 = vadd.f32 %v2182, %v2243
    %2245 = vmatmul.bf16.gmra.mxu0 %v2180
    %v2246 = vpop.f32.mrf.mxu0
    %v2247 = vadd.f32 %v2182, %v2246
    %v2248 = vpop.f32.mrf.mxu0
    %v2249 = vadd.f32 %v2182, %v2248
    %2250 = vdwg.mxu0
    %v2251 = vmax.f32 %v2242, 0.0
    %v2252 = vmax.f32 %v2244, 0.0
    %v2253 = vmax.f32 %v2247, 0.0
    %v2254 = vmax.f32 %v2249, 0.0
    %v2255 = vpack.c.bf16 %v2252, %v2251
    %v2256 = vpack.c.bf16 %v2254, %v2253
    %v2258 = vperm.slane %v2100, 0
    %v2276 = vunpack.c.l.b16 %v2084
    %v2277 = vunpack.c.l.b16 %v2085
    %v2278 = vunpack.c.l.b16 %v2086
    %v2279 = vunpack.c.l.b16 %v2087
    %v2280 = vunpack.c.l.b16 %v2088
    %v2281 = vunpack.c.l.b16 %v2089
    %v2282 = vunpack.c.l.b16 %v2090
    %v2283 = vunpack.c.l.b16 %v2091
    %v2284 = vunpack.c.l.b16 %v2092
    %v2285 = vunpack.c.l.b16 %v2093
    %v2286 = vunpack.c.l.b16 %v2094
    %v2287 = vunpack.c.l.b16 %v2095
    %v2288 = vunpack.c.l.b16 %v2096
    %v2289 = vunpack.c.l.b16 %v2097
    %v2290 = vunpack.c.l.b16 %v2098
    %v2291 = vunpack.c.l.b16 %v2099
    %v2292 = vpack.c.b16 %v2277, %v2276
    %v2293 = vpack.c.b16 %v2279, %v2278
    %v2294 = vpack.c.b16 %v2281, %v2280
    %v2295 = vpack.c.b16 %v2283, %v2282
    %v2296 = vpack.c.b16 %v2285, %v2284
    %v2297 = vpack.c.b16 %v2287, %v2286
    %v2298 = vpack.c.b16 %v2289, %v2288
    %v2299 = vpack.c.b16 %v2291, %v2290
    %2308 = vmatpush.bf16.msra.mxu0 %v2299
    %2309 = vmatpush.bf16.msra.mxu0 %v2298
    %2310 = vmatpush.bf16.msra.mxu0 %v2297
    %2311 = vmatpush.bf16.msra.mxu0 %v2296
    %2312 = vmatpush.bf16.msra.mxu0 %v2295
    %2313 = vmatpush.bf16.msra.mxu0 %v2294
    %2314 = vmatpush.bf16.msra.mxu0 %v2293
    %2315 = vmatpush.bf16.msra.mxu0 %v2292
    %2316 = vmatmul.bf16.gmra.mxu0 %v2255
    %v2317 = vpop.f32.mrf.mxu0
    %v2318 = vadd.f32 %v2258, %v2317
    %v2319 = vpop.f32.mrf.mxu0
    %v2320 = vadd.f32 %v2258, %v2319
    %2321 = vmatmul.bf16.gmra.mxu0 %v2256
    %v2322 = vpop.f32.mrf.mxu0
    %v2323 = vadd.f32 %v2258, %v2322
    %v2324 = vpop.f32.mrf.mxu0
    %v2325 = vadd.f32 %v2258, %v2324
    %2326 = vdwg.mxu0
    %2327 = vadd.xlane.f32.xlu0 %v2318
    %v2328 = vpop.xlane.xlu0 %2327
    %2329 = vadd.xlane.f32.xlu0 %v2320
    %v2330 = vpop.xlane.xlu0 %2329
    %2331 = vadd.xlane.f32.xlu0 %v2323
    %v2332 = vpop.xlane.xlu0 %2331
    %2333 = vadd.xlane.f32.xlu0 %v2325
    %v2334 = vpop.xlane.xlu0 %2333
    %v2335 = vmul.f32 %v2328, %v1645
    %v2336 = vmul.f32 %v2330, %v1645
    %v2337 = vmul.f32 %v2332, %v1645
    %v2338 = vmul.f32 %v2334, %v1645
    %v2339 = vsub.f32 %v2318, %v2335
    %v2340 = vsub.f32 %v2320, %v2336
    %v2341 = vsub.f32 %v2323, %v2337
    %v2342 = vsub.f32 %v2325, %v2338
    %v2343 = vmul.f32 %v2339, %v2339
    %v2344 = vmul.f32 %v2340, %v2340
    %v2345 = vmul.f32 %v2341, %v2341
    %v2346 = vmul.f32 %v2342, %v2342
    %2347 = vadd.xlane.f32.xlu0 %v2343
    %v2348 = vpop.xlane.xlu0 %2347
    %2349 = vadd.xlane.f32.xlu0 %v2344
    %v2350 = vpop.xlane.xlu0 %2349
    %2351 = vadd.xlane.f32.xlu0 %v2345
    %v2352 = vpop.xlane.xlu0 %2351
    %2353 = vadd.xlane.f32.xlu0 %v2346
    %v2354 = vpop.xlane.xlu0 %2353
    %v2355 = vmul.f32 %v2348, %v1645
    %v2356 = vmul.f32 %v2350, %v1645
    %v2357 = vmul.f32 %v2352, %v1645
    %v2358 = vmul.f32 %v2354, %v1645
    %v2359 = vadd.f32 %v2355, 1e-05
    %v2360 = vadd.f32 %v2356, 1e-05
    %v2361 = vadd.f32 %v2357, 1e-05
    %v2362 = vadd.f32 %v2358, 1e-05
    %v2363 = vrsqrt.pop %v2359
    %v2364 = vmul.f32 %v2363, %v2359
    %v2365 = vmul.f32 %v2364, %v2363
    %v2366 = vmul.f32 0.5, %v2365
    %v2367 = vsub.f32 1.5, %v2366
    %v2368 = vmul.f32 %v2363, %v2367
    %vm2369 = vweird.f32 %v2359
    %vm2370 = vweird.f32 %v2363
    %vm2371 = vmor %vm2369, %vm2370
    %v2372 = vsel %vm2371, %v2363, %v2368
    %v2373 = vrsqrt.pop %v2360
    %v2374 = vmul.f32 %v2373, %v2360
    %v2375 = vmul.f32 %v2374, %v2373
    %v2376 = vmul.f32 0.5, %v2375
    %v2377 = vsub.f32 1.5, %v2376
    %v2378 = vmul.f32 %v2373, %v2377
    %vm2379 = vweird.f32 %v2360
    %vm2380 = vweird.f32 %v2373
    %vm2381 = vmor %vm2379, %vm2380
    %v2382 = vsel %vm2381, %v2373, %v2378
    %v2383 = vrsqrt.pop %v2361
    %v2384 = vmul.f32 %v2383, %v2361
    %v2385 = vmul.f32 %v2384, %v2383
    %v2386 = vmul.f32 0.5, %v2385
    %v2387 = vsub.f32 1.5, %v2386
    %v2388 = vmul.f32 %v2383, %v2387
    %vm2389 = vweird.f32 %v2361
    %vm2390 = vweird.f32 %v2383
    %vm2391 = vmor %vm2389, %vm2390
    %v2392 = vsel %vm2391, %v2383, %v2388
    %v2393 = vrsqrt.pop %v2362
    %v2394 = vmul.f32 %v2393, %v2362
    %v2395 = vmul.f32 %v2394, %v2393
    %v2396 = vmul.f32 0.5, %v2395
    %v2397 = vsub.f32 1.5, %v2396
    %v2398 = vmul.f32 %v2393, %v2397
    %vm2399 = vweird.f32 %v2362
    %vm2400 = vweird.f32 %v2393
    %vm2401 = vmor %vm2399, %vm2400
    %v2402 = vsel %vm2401, %v2393, %v2398
    %v2403 = vmul.f32 %v2339, %v2372
    %v2404 = vmul.f32 %v2340, %v2382
    %v2405 = vmul.f32 %v2341, %v2392
    %v2406 = vmul.f32 %v2342, %v2402
    %v2408 = vperm.slane %v2101, 0
    %v2410 = vmul.f32 %v2403, %v2408
    %v2411 = vmul.f32 %v2404, %v2408
    %v2412 = vmul.f32 %v2405, %v2408
    %v2413 = vmul.f32 %v2406, %v2408
    %v2415 = vperm.slane %v2102, 0
    %v2417 = vadd.f32 %v2410, %v2415
    %v2418 = vadd.f32 %v2411, %v2415
    %v2419 = vadd.f32 %v2412, %v2415
    %v2420 = vadd.f32 %v2413, %v2415
    %v2421 = vadd.f32 %v2417, %v207
    %v2422 = vadd.f32 %v2418, %v208
    %v2423 = vadd.f32 %v2419, %v209
    %v2424 = vadd.f32 %v2420, %v210
    %2425 = vst [vmem:[#allocation16] sm:$0xff] %v2421
    %2426 = vst [vmem:[#allocation16 + $0x8] sm:$0xff] %v2422
    %2427 = vst [vmem:[#allocation16 + $0x10] sm:$0xff] %v2423
    %2428 = vst [vmem:[#allocation16 + $0x18] sm:$0xff] %v2424
    // Predicated region
    $region130: #{interaction_network_attention.1} parent=1 // pred_check
      _
    $region131: #{interaction_network_attention.1} parent=1 // pred_check_branch
      %2430 = sbr.rel (0) target = $region133
    $region132: #{interaction_network_attention.1} parent=1 // pred_region
      %2432 = vsyncadd [#allocation4], 0
      %s2433 = sshll.u32 [#allocation16], 4
      %s2434 = int_to_ptr.vmem [resolvable:$true] %s2433
      %s2435 = sshll.u32 %s24, 4
      %s2436 = int_to_ptr.hbm [resolvable:$true] %s2435
      %2441 = dma.vmem_to_hbm [thread:$0]  %s2434, 512, %s2436, [#allocation4], 128, 128, 8
    $region133: #{interaction_network_attention.1} parent=1 // pred_fallthru
      _
    // Predicated region
    $region134: #{interaction_network_attention.1} parent=1 // pred_check
      _
    $region135: #{interaction_network_attention.1} parent=1 // pred_check_branch
      %2443 = sbr.rel (0) target = $region137
    $region136: #{interaction_network_attention.1} parent=1 // pred_region
      %2445 = vsyncadd [#allocation18], 0
      %s2446 = sshll.u32 [#allocation17], 4
      %s2447 = int_to_ptr.vmem [resolvable:$true] %s2446
      %s2448 = sshll.u32 %s25, 4
      %s2449 = int_to_ptr.hbm [resolvable:$true] %s2448
      %2454 = dma.vmem_to_hbm [thread:$0]  %s2447, 1024, %s2449, [#allocation18], 128, 128, 8
    $region137: #{interaction_network_attention.1} parent=1 // pred_fallthru
      _
    // Predicated region
    $region138: #{interaction_network_attention.1} parent=1 // pred_check
      _
    $region139: #{interaction_network_attention.1} parent=1 // pred_check_branch
      %2456 = sbr.rel (0) target = $region141
    $region140: #{interaction_network_attention.1} parent=1 // pred_region
      %2458 = dma.done [#allocation4], 512
    $region141: #{interaction_network_attention.1} parent=1 // pred_fallthru
      _
    // Predicated region
    $region142: #{interaction_network_attention.1} parent=1 // pred_check
      _
    $region143: #{interaction_network_attention.1} parent=1 // pred_check_branch
      %2460 = sbr.rel (0) target = $region145
    $region144: #{interaction_network_attention.1} parent=1 // pred_region
      %2462 = dma.done [#allocation18], 1024
    $region145: #{interaction_network_attention.1} parent=1 // pred_fallthru
      _
    %2463 = vsyncpa [#allocation3], 1
    %2464 = vsyncpa [#allocation6], 1
    %2465 = vsyncpa [#allocation9], 1
    %2466 = vsyncpa [#allocation12], 1
    %2467 = vsyncpa [#allocation15], 1
    %2468 = vsyncpa [#allocation4], 1
    %2469 = vsyncpa [#allocation18], 1

</llo_original>
